<compile_context>
chip_gen: v5e
topology: v5e:2x2
jax: 0.10.0
libtpu: 0.0.40
codegen_flags: <defaults>
</compile_context>

<pallas_src>
import functools

import jax
import jax.numpy as jnp
import numpy as np
from jax.experimental import pallas as pl
from jax.experimental.pallas import tpu as pltpu

BN_EPS = 1e-5
LANE = 128


# ------------------------------- helpers ----------------------------------- #
def _round_up(x, m):
    return (x + m - 1) // m * m


def _row_tile(m):
    """Largest row tile (multiple of 8) that still leaves >=2 grid steps."""
    for t in (512, 256, 128, 64, 32, 16, 8):
        if m >= 2 * t:
            return t
    return max(8, _round_up(m, 8))


def _pad_last(a, size):
    c = a.shape[-1]
    if c == size:
        return a
    return jnp.pad(a, [(0, 0)] * (a.ndim - 1) + [(0, size - c)])


def _pad_rows(a, rows):
    if a.shape[0] == rows:
        return a
    return jnp.pad(a, [(0, rows - a.shape[0])] + [(0, 0)] * (a.ndim - 1))


def _fold_bn(bn):
    scale = bn["gamma"] * jax.lax.rsqrt(bn["var"] + BN_EPS)
    bias = bn["beta"] - bn["mean"] * scale
    return scale, bias


# ----------------------------- Pallas kernel ------------------------------- #
def _shift_conv_kernel(x_ref, w_ref, b_ref, *rest, taps, lead, tm,
                       apply_relu, res_mode):
    """Fused 3x3 conv (9 shifted matmuls) + folded-BN bias
    [+ identity residual | + fused 1x1-conv-BN shortcut] [+ ReLU]."""
    if res_mode == "project":
        r_ref, wp_ref, bp_ref, o_ref = rest
    elif res_mode == "add":
        r_ref, o_ref = rest
    else:
        (o_ref,) = rest

    base = pl.multiple_of(pl.program_id(0) * tm, tm) + lead
    acc = jnp.zeros((tm, o_ref.shape[-1]), jnp.float32)
    for t, (p, d) in enumerate(taps):                 # 9 taps, fully unrolled
        lhs = x_ref[p, pl.ds(base + d, tm), :].astype(jnp.bfloat16)
        acc = acc + jnp.dot(lhs, w_ref[t], preferred_element_type=jnp.float32)
    y = acc + b_ref[...]                              # folded BN bias (f32)

    if res_mode == "project":                         # fused 1x1-conv + BN shortcut
        y = y + jnp.dot(r_ref[...], wp_ref[...],
                        preferred_element_type=jnp.float32) + bp_ref[...]
    elif res_mode == "add":                           # identity shortcut
        y = y + r_ref[...].astype(jnp.float32)

    if apply_relu:
        y = jnp.maximum(y, 0.0)
    o_ref[...] = y.astype(o_ref.dtype)


# ----------------------------- conv wrapper -------------------------------- #
def fused_conv3x3_bn(x_nhwc, w_oihw, bn, *, stride, apply_relu, cout_pad,
                     residual=None, res_proj_w=None, res_proj_bn=None,
                     out_dtype=jnp.float32):
    """3x3 conv (padding=1, stride in {1,2}) + folded BatchNorm
    + optional fused shortcut (+ ReLU).

    x_nhwc   : (N, H, W, Cin) activation (extra channels may be zero padding).
    w_oihw   : (Cout, Cin_w, 3, 3) conv weight, Cin_w <= Cin.
    residual : (N, Hout, Wout, Cr), added after BN; if res_proj_w/bn are given
               it is first projected by the fused 1x1-conv + BN shortcut.
    Returns (N, Hout, Wout, cout_pad); channels [Cout:cout_pad] are zero.
    """
    N, H, W, Cin = x_nhwc.shape
    Cout = w_oihw.shape[0]
    Hout = (H - 1) // stride + 1
    Wout = (W - 1) // stride + 1

    xp = jnp.pad(x_nhwc, ((0, 0), (1, 1), (1, 1), (0, 0)))    # conv padding=1

    if stride == 1:
        Hs, Ws = H + 2, W + 2
        src_planes = [xp]
        taps = tuple((0, (kh - 1) * Ws + (kw - 1))
                     for kh in range(3) for kw in range(3))
        vh0, vw0 = 1, 1            # valid-output offset on the computed grid
    elif stride == 2:
        # space-to-depth phase decomposition -> every tap is a flat-row shift
        if xp.shape[1] % 2:
            xp = jnp.pad(xp, ((0, 0), (0, 1), (0, 0), (0, 0)))
        if xp.shape[2] % 2:
            xp = jnp.pad(xp, ((0, 0), (0, 0), (0, 1), (0, 0)))
        Hs, Ws = xp.shape[1] // 2, xp.shape[2] // 2
        src_planes = [xp[:, p::2, q::2, :] for p in range(2) for q in range(2)]
        taps = tuple(((kh % 2) * 2 + (kw % 2), (kh // 2) * Ws + (kw // 2))
                     for kh in range(3) for kw in range(3))
        vh0, vw0 = 0, 0
    else:
        raise NotImplementedError("stride must be 1 or 2")

    M = N * Hs * Ws                      # rows of the computed (extended) grid
    tm = _row_tile(M)
    m_pad = _round_up(M, tm)
    grid = (m_pad // tm,)

    lead = max(0, -min(d for _, d in taps))
    trail = max(0, max(d for _, d in taps)) + (m_pad - M)
    trail += (-(lead + M + trail)) % 8   # keep total rows a multiple of 8
    src = jnp.stack([p.reshape(M, Cin) for p in src_planes])       # (P, M, Cin)
    src = jnp.pad(src, ((0, 0), (lead, trail), (0, 0))).astype(jnp.float32)
    P, r_src, _ = src.shape

    # fold BN scale into the weights, pad Cout to the lane width
    scale, bias = _fold_bn(bn)
    w = jnp.transpose(w_oihw, (2, 3, 1, 0)).astype(jnp.float32)    # (3,3,Cin_w,Cout)
    if w.shape[2] < Cin:                 # x carries zero-padded input channels
        w = jnp.pad(w, ((0, 0), (0, 0), (0, Cin - w.shape[2]), (0, 0)))
    w_taps = _pad_last((w * scale).reshape(9, Cin, Cout),
                       cout_pad).astype(jnp.bfloat16)              # (9,Cin,cout_pad)
    b = _pad_last(bias.reshape(1, Cout), cout_pad)                 # (1,cout_pad) f32

    res_mode = "none"
    extra_args, extra_specs = [], []
    if residual is not None:
        # embed the residual on the extended grid, aligned with valid outputs
        r = jnp.pad(residual, ((0, 0), (vh0, Hs - vh0 - Hout),
                               (vw0, Ws - vw0 - Wout), (0, 0)))
        if res_proj_w is None:
            res_mode = "add"
            r = _pad_last(r, cout_pad)
        else:
            res_mode = "project"
        cr = r.shape[-1]
        r = _pad_rows(r.reshape(M, cr), m_pad).astype(jnp.bfloat16)
        extra_args.append(r)
        extra_specs.append(pl.BlockSpec((tm, cr), lambda i: (i, 0)))
        if res_mode == "project":
            ps, pb = _fold_bn(res_proj_bn)
            wp = jnp.transpose(res_proj_w[:, :, 0, 0]).astype(jnp.float32)
            wp = _pad_last(wp * ps, cout_pad).astype(jnp.bfloat16)   # (Cin_r,cout_pad)
            pbias = _pad_last(pb.reshape(1, Cout), cout_pad)         # (1,cout_pad) f32
            extra_args += [wp, pbias]
            extra_specs += [pl.BlockSpec(wp.shape, lambda i: (0, 0)),
                            pl.BlockSpec(pbias.shape, lambda i: (0, 0))]

    kernel = functools.partial(_shift_conv_kernel, taps=taps, lead=lead, tm=tm,
                               apply_relu=apply_relu, res_mode=res_mode)

    out_flat = pl.pallas_call(
        kernel,
        out_shape=jax.ShapeDtypeStruct((m_pad, cout_pad), out_dtype),
        grid_spec=pl.GridSpec(
            grid=grid,
            in_specs=[
                pl.BlockSpec((P, r_src, Cin), lambda i: (0, 0, 0)),     # resident src
                pl.BlockSpec((9, Cin, cout_pad), lambda i: (0, 0, 0)),  # resident w
                pl.BlockSpec((1, cout_pad), lambda i: (0, 0)),          # resident bias
                *extra_specs,
            ],
            out_specs=pl.BlockSpec((tm, cout_pad), lambda i: (i, 0)),   # lane-dense
        ),
        compiler_params=pltpu.CompilerParams(
            dimension_semantics=("parallel",),
            vmem_limit_bytes=48 * 1024 * 1024),
    )(src, w_taps, b, *extra_args)

    out = out_flat[:M].reshape(N, Hs, Ws, cout_pad)
    return out[:, vh0:vh0 + Hout, vw0:vw0 + Wout, :]


# ----------------------------- BasicBlock ----------------------------------- #
def basic_block_forward(x_nchw, params, stride):
    """ResNet BasicBlock forward (eval-mode BN). Input/output NCHW float32."""
    x = jnp.transpose(x_nchw, (0, 2, 3, 1)).astype(jnp.float32)    # NHWC
    _, _, _, cin = x.shape
    planes = params["w1"].shape[0]
    cpad = _round_up(planes, LANE)       # lane-dense channel padding

    # conv1 + bn1 + relu (bf16 intermediate feeds conv2 directly)
    out1 = fused_conv3x3_bn(x, params["w1"], params["bn1"], stride=stride,
                            apply_relu=True, cout_pad=cpad,
                            out_dtype=jnp.bfloat16)

    # conv2 + bn2 + shortcut + relu, all fused in one kernel
    if stride != 1 or cin != planes:
        res = x[:, ::stride, ::stride, :]          # input of the 1x1 projection
        out = fused_conv3x3_bn(out1, params["w2"], params["bn2"], stride=1,
                               apply_relu=True, cout_pad=cpad,
                               residual=res, res_proj_w=params["ws"],
                               res_proj_bn=params["bns"],
                               out_dtype=jnp.float32)
    else:
        out = fused_conv3x3_bn(out1, params["w2"], params["bn2"], stride=1,
                               apply_relu=True, cout_pad=cpad,
                               residual=x, out_dtype=jnp.float32)

    out = out[..., :planes]                        # drop channel padding
    return jnp.transpose(out, (0, 3, 1, 2))        # back to NCHW


basic_block_fwd = jax.jit(basic_block_forward, static_argnums=2)


# ----------------------------- pure-JAX reference --------------------------- #
def reference_forward(x_nchw, params, stride):
    x = jnp.transpose(x_nchw, (0, 2, 3, 1)).astype(jnp.float32)
    cin = x.shape[-1]
    planes = params["w1"].shape[0]

    def conv(inp, w, s, pad):
        w_hwio = jnp.transpose(w, (2, 3, 1, 0))
        return jax.lax.conv_general_dilated(
            inp, w_hwio, (s, s), [(pad, pad), (pad, pad)],
            dimension_numbers=("NHWC", "HWIO", "NHWC"))

    def bn(inp, p):
        sc = p["gamma"] / jnp.sqrt(p["var"] + BN_EPS)
        return inp * sc + (p["beta"] - p["mean"] * sc)

    out = jax.nn.relu(bn(conv(x, params["w1"], stride, 1), params["bn1"]))
    out = bn(conv(out, params["w2"], 1, 1), params["bn2"])
    if stride != 1 or cin != planes:
        sc = bn(conv(x, params["ws"], stride, 0), params["bns"])
    else:
        sc = x
    return jnp.transpose(jax.nn.relu(out + sc), (0, 3, 1, 2))


# --------------------------------- main ------------------------------------ #
def make_params(key, in_planes, planes, stride):
    ks = jax.random.split(key, 12)

    def bn_params(k0, k1, k2, k3, c):
        return {
            "gamma": jax.random.uniform(k0, (c,), jnp.float32, 0.5, 1.5),
            "beta": 0.1 * jax.random.normal(k1, (c,), jnp.float32),
            "mean": 0.1 * jax.random.normal(k2, (c,), jnp.float32),
            "var": jax.random.uniform(k3, (c,), jnp.float32, 0.5, 1.5),
        }

    params = {
        "w1": 0.1 * jax.random.normal(ks[0], (planes, in_planes, 3, 3), jnp.float32),
        "bn1": bn_params(ks[1], ks[2], ks[3], ks[4], planes),
        "w2": 0.1 * jax.random.normal(ks[5], (planes, planes, 3, 3), jnp.float32),
        "bn2": bn_params(ks[6], ks[7], ks[8], ks[9], planes),
    }
    if stride != 1 or in_planes != planes:
        params["ws"] = 0.1 * jax.random.normal(ks[10], (planes, in_planes, 1, 1),
                                               jnp.float32)
        params["bns"] = bn_params(ks[11], ks[2], ks[3], ks[4], planes)
    return params


def _run_case(key, n, in_planes, planes, h, w, stride):
    k_x, k_p = jax.random.split(key)
    x = jax.random.normal(k_x, (n, in_planes, h, w), jnp.float32)
    params = make_params(k_p, in_planes, planes, stride)

    out = jax.block_until_ready(basic_block_fwd(x, params, stride))
    ref = jax.block_until_ready(reference_forward(x, params, stride))

    h1 = (h - 1) // stride + 1
    w1 = (w - 1) // stride + 1
    assert out.shape == (n, planes, h1, w1), out.shape
    # bf16 MXU operands -> compare against the f32 reference with bf16-level tolerance
    np.testing.assert_allclose(np.asarray(out), np.asarray(ref),
                               rtol=3e-2, atol=3e-2)


if __name__ == "__main__":
    key = jax.random.PRNGKey(0)
    k1, k2 = jax.random.split(key)

    # downsampling block: stride-2 conv1 + fused 1x1-conv+BN projected shortcut
    _run_case(k1, 2, 4, 8, 16, 16, 2)
    # identity block: stride-1 convs + fused residual add
    _run_case(k2, 2, 8, 8, 8, 8, 1)

    print("KERNEL_OK")
</pallas_src>

<mosaic_0001>
module attributes {stable_mosaic.version = 11 : i64} {
  func.func @_shift_conv_kernel(%arg0: i32, %arg1: memref<4x208x4xf32, #tpu.memory_space<vmem>>, %arg2: memref<9x4x128xbf16, #tpu.memory_space<vmem>>, %arg3: memref<1x128xf32, #tpu.memory_space<vmem>>, %arg4: memref<64x128xbf16, #tpu.memory_space<vmem>>) attributes {dimension_semantics = [#tpu.dimension_semantics<parallel>], iteration_bounds = array<i64: 3>, scalar_prefetch = 0 : i64, scratch_operands = 0 : i64, tpu.core_type = #tpu.core_type<tc>, window_params = [{pipeline_mode = #tpu.pipeline_mode<synchronous>, transform_indices = @transform_0, window_bounds = array<i64: 4, 208, 4>}, {pipeline_mode = #tpu.pipeline_mode<synchronous>, transform_indices = @transform_1, window_bounds = array<i64: 9, 4, 128>}, {pipeline_mode = #tpu.pipeline_mode<synchronous>, transform_indices = @transform_2, window_bounds = array<i64: 1, 128>}, {transform_indices = @transform_3, window_bounds = array<i64: 64, 128>}]} {
    %c64_i32 = arith.constant 64 : i32
    %0 = arith.muli %arg0, %c64_i32 : i32
    %1 = tpu.assume_multiple %0, 64 : i32
    %c0_i32 = arith.constant 0 : i32
    %2 = arith.addi %1, %c0_i32 : i32
    %cst = arith.constant 0.000000e+00 : f32
    %3 = vector.broadcast %cst : f32 to vector<64x128xf32>
    %c0_i32_0 = arith.constant 0 : i32
    %4 = arith.addi %2, %c0_i32_0 : i32
    %c0 = arith.constant 0 : index
    %5 = arith.index_cast %4 : i32 to index
    %c0_1 = arith.constant 0 : index
    %6 = vector.load %arg1[%c0, %5, %c0_1] : memref<4x208x4xf32, #tpu.memory_space<vmem>>, vector<1x64x4xf32>
    %7 = vector.shape_cast %6 : vector<1x64x4xf32> to vector<64x4xf32>
    %8 = arith.truncf %7 : vector<64x4xf32> to vector<64x4xbf16>
    %c0_2 = arith.constant 0 : index
    %c0_3 = arith.constant 0 : index
    %c0_4 = arith.constant 0 : index
    %9 = vector.load %arg2[%c0_2, %c0_3, %c0_4] : memref<9x4x128xbf16, #tpu.memory_space<vmem>>, vector<1x4x128xbf16>
    %10 = vector.shape_cast %9 : vector<1x4x128xbf16> to vector<4x128xbf16>
    %cst_5 = arith.constant dense<0.000000e+00> : vector<64x128xf32>
    %11 = tpu.matmul %8, %10, %cst_5 {dimension_numbers = #tpu.dot_dimension_numbers<[1], [0], [0], [1], [0, 0, 1, 1], [], []>} : vector<64x4xbf16>, vector<4x128xbf16>, vector<64x128xf32> -> vector<64x128xf32>
    %12 = arith.addf %3, %11 : vector<64x128xf32>
    %c0_i32_6 = arith.constant 0 : i32
    %13 = arith.addi %2, %c0_i32_6 : i32
    %c1 = arith.constant 1 : index
    %14 = arith.index_cast %13 : i32 to index
    %c0_7 = arith.constant 0 : index
    %15 = vector.load %arg1[%c1, %14, %c0_7] : memref<4x208x4xf32, #tpu.memory_space<vmem>>, vector<1x64x4xf32>
    %16 = vector.shape_cast %15 : vector<1x64x4xf32> to vector<64x4xf32>
    %17 = arith.truncf %16 : vector<64x4xf32> to vector<64x4xbf16>
    %c1_8 = arith.constant 1 : index
    %c0_9 = arith.constant 0 : index
    %c0_10 = arith.constant 0 : index
    %18 = vector.load %arg2[%c1_8, %c0_9, %c0_10] : memref<9x4x128xbf16, #tpu.memory_space<vmem>>, vector<1x4x128xbf16>
    %19 = vector.shape_cast %18 : vector<1x4x128xbf16> to vector<4x128xbf16>
    %cst_11 = arith.constant dense<0.000000e+00> : vector<64x128xf32>
    %20 = tpu.matmul %17, %19, %cst_11 {dimension_numbers = #tpu.dot_dimension_numbers<[1], [0], [0], [1], [0, 0, 1, 1], [], []>} : vector<64x4xbf16>, vector<4x128xbf16>, vector<64x128xf32> -> vector<64x128xf32>
    %21 = arith.addf %12, %20 : vector<64x128xf32>
    %c1_i32 = arith.constant 1 : i32
    %22 = arith.addi %2, %c1_i32 : i32
    %c0_12 = arith.constant 0 : index
    %23 = arith.index_cast %22 : i32 to index
    %c0_13 = arith.constant 0 : index
    %24 = vector.load %arg1[%c0_12, %23, %c0_13] : memref<4x208x4xf32, #tpu.memory_space<vmem>>, vector<1x64x4xf32>
    %25 = vector.shape_cast %24 : vector<1x64x4xf32> to vector<64x4xf32>
    %26 = arith.truncf %25 : vector<64x4xf32> to vector<64x4xbf16>
    %c2 = arith.constant 2 : index
    %c0_14 = arith.constant 0 : index
    %c0_15 = arith.constant 0 : index
    %27 = vector.load %arg2[%c2, %c0_14, %c0_15] : memref<9x4x128xbf16, #tpu.memory_space<vmem>>, vector<1x4x128xbf16>
    %28 = vector.shape_cast %27 : vector<1x4x128xbf16> to vector<4x128xbf16>
    %cst_16 = arith.constant dense<0.000000e+00> : vector<64x128xf32>
    %29 = tpu.matmul %26, %28, %cst_16 {dimension_numbers = #tpu.dot_dimension_numbers<[1], [0], [0], [1], [0, 0, 1, 1], [], []>} : vector<64x4xbf16>, vector<4x128xbf16>, vector<64x128xf32> -> vector<64x128xf32>
    %30 = arith.addf %21, %29 : vector<64x128xf32>
    %c0_i32_17 = arith.constant 0 : i32
    %31 = arith.addi %2, %c0_i32_17 : i32
    %c2_18 = arith.constant 2 : index
    %32 = arith.index_cast %31 : i32 to index
    %c0_19 = arith.constant 0 : index
    %33 = vector.load %arg1[%c2_18, %32, %c0_19] : memref<4x208x4xf32, #tpu.memory_space<vmem>>, vector<1x64x4xf32>
    %34 = vector.shape_cast %33 : vector<1x64x4xf32> to vector<64x4xf32>
    %35 = arith.truncf %34 : vector<64x4xf32> to vector<64x4xbf16>
    %c3 = arith.constant 3 : index
    %c0_20 = arith.constant 0 : index
    %c0_21 = arith.constant 0 : index
    %36 = vector.load %arg2[%c3, %c0_20, %c0_21] : memref<9x4x128xbf16, #tpu.memory_space<vmem>>, vector<1x4x128xbf16>
    %37 = vector.shape_cast %36 : vector<1x4x128xbf16> to vector<4x128xbf16>
    %cst_22 = arith.constant dense<0.000000e+00> : vector<64x128xf32>
    %38 = tpu.matmul %35, %37, %cst_22 {dimension_numbers = #tpu.dot_dimension_numbers<[1], [0], [0], [1], [0, 0, 1, 1], [], []>} : vector<64x4xbf16>, vector<4x128xbf16>, vector<64x128xf32> -> vector<64x128xf32>
    %39 = arith.addf %30, %38 : vector<64x128xf32>
    %c0_i32_23 = arith.constant 0 : i32
    %40 = arith.addi %2, %c0_i32_23 : i32
    %c3_24 = arith.constant 3 : index
    %41 = arith.index_cast %40 : i32 to index
    %c0_25 = arith.constant 0 : index
    %42 = vector.load %arg1[%c3_24, %41, %c0_25] : memref<4x208x4xf32, #tpu.memory_space<vmem>>, vector<1x64x4xf32>
    %43 = vector.shape_cast %42 : vector<1x64x4xf32> to vector<64x4xf32>
    %44 = arith.truncf %43 : vector<64x4xf32> to vector<64x4xbf16>
    %c4 = arith.constant 4 : index
    %c0_26 = arith.constant 0 : index
    %c0_27 = arith.constant 0 : index
    %45 = vector.load %arg2[%c4, %c0_26, %c0_27] : memref<9x4x128xbf16, #tpu.memory_space<vmem>>, vector<1x4x128xbf16>
    %46 = vector.shape_cast %45 : vector<1x4x128xbf16> to vector<4x128xbf16>
    %cst_28 = arith.constant dense<0.000000e+00> : vector<64x128xf32>
    %47 = tpu.matmul %44, %46, %cst_28 {dimension_numbers = #tpu.dot_dimension_numbers<[1], [0], [0], [1], [0, 0, 1, 1], [], []>} : vector<64x4xbf16>, vector<4x128xbf16>, vector<64x128xf32> -> vector<64x128xf32>
    %48 = arith.addf %39, %47 : vector<64x128xf32>
    %c1_i32_29 = arith.constant 1 : i32
    %49 = arith.addi %2, %c1_i32_29 : i32
    %c2_30 = arith.constant 2 : index
    %50 = arith.index_cast %49 : i32 to index
    %c0_31 = arith.constant 0 : index
    %51 = vector.load %arg1[%c2_30, %50, %c0_31] : memref<4x208x4xf32, #tpu.memory_space<vmem>>, vector<1x64x4xf32>
    %52 = vector.shape_cast %51 : vector<1x64x4xf32> to vector<64x4xf32>
    %53 = arith.truncf %52 : vector<64x4xf32> to vector<64x4xbf16>
    %c5 = arith.constant 5 : index
    %c0_32 = arith.constant 0 : index
    %c0_33 = arith.constant 0 : index
    %54 = vector.load %arg2[%c5, %c0_32, %c0_33] : memref<9x4x128xbf16, #tpu.memory_space<vmem>>, vector<1x4x128xbf16>
    %55 = vector.shape_cast %54 : vector<1x4x128xbf16> to vector<4x128xbf16>
    %cst_34 = arith.constant dense<0.000000e+00> : vector<64x128xf32>
    %56 = tpu.matmul %53, %55, %cst_34 {dimension_numbers = #tpu.dot_dimension_numbers<[1], [0], [0], [1], [0, 0, 1, 1], [], []>} : vector<64x4xbf16>, vector<4x128xbf16>, vector<64x128xf32> -> vector<64x128xf32>
    %57 = arith.addf %48, %56 : vector<64x128xf32>
    %c9_i32 = arith.constant 9 : i32
    %58 = arith.addi %2, %c9_i32 : i32
    %c0_35 = arith.constant 0 : index
    %59 = arith.index_cast %58 : i32 to index
    %c0_36 = arith.constant 0 : index
    %60 = vector.load %arg1[%c0_35, %59, %c0_36] : memref<4x208x4xf32, #tpu.memory_space<vmem>>, vector<1x64x4xf32>
    %61 = vector.shape_cast %60 : vector<1x64x4xf32> to vector<64x4xf32>
    %62 = arith.truncf %61 : vector<64x4xf32> to vector<64x4xbf16>
    %c6 = arith.constant 6 : index
    %c0_37 = arith.constant 0 : index
    %c0_38 = arith.constant 0 : index
    %63 = vector.load %arg2[%c6, %c0_37, %c0_38] : memref<9x4x128xbf16, #tpu.memory_space<vmem>>, vector<1x4x128xbf16>
    %64 = vector.shape_cast %63 : vector<1x4x128xbf16> to vector<4x128xbf16>
    %cst_39 = arith.constant dense<0.000000e+00> : vector<64x128xf32>
    %65 = tpu.matmul %62, %64, %cst_39 {dimension_numbers = #tpu.dot_dimension_numbers<[1], [0], [0], [1], [0, 0, 1, 1], [], []>} : vector<64x4xbf16>, vector<4x128xbf16>, vector<64x128xf32> -> vector<64x128xf32>
    %66 = arith.addf %57, %65 : vector<64x128xf32>
    %c9_i32_40 = arith.constant 9 : i32
    %67 = arith.addi %2, %c9_i32_40 : i32
    %c1_41 = arith.constant 1 : index
    %68 = arith.index_cast %67 : i32 to index
    %c0_42 = arith.constant 0 : index
    %69 = vector.load %arg1[%c1_41, %68, %c0_42] : memref<4x208x4xf32, #tpu.memory_space<vmem>>, vector<1x64x4xf32>
    %70 = vector.shape_cast %69 : vector<1x64x4xf32> to vector<64x4xf32>
    %71 = arith.truncf %70 : vector<64x4xf32> to vector<64x4xbf16>
    %c7 = arith.constant 7 : index
    %c0_43 = arith.constant 0 : index
    %c0_44 = arith.constant 0 : index
    %72 = vector.load %arg2[%c7, %c0_43, %c0_44] : memref<9x4x128xbf16, #tpu.memory_space<vmem>>, vector<1x4x128xbf16>
    %73 = vector.shape_cast %72 : vector<1x4x128xbf16> to vector<4x128xbf16>
    %cst_45 = arith.constant dense<0.000000e+00> : vector<64x128xf32>
    %74 = tpu.matmul %71, %73, %cst_45 {dimension_numbers = #tpu.dot_dimension_numbers<[1], [0], [0], [1], [0, 0, 1, 1], [], []>} : vector<64x4xbf16>, vector<4x128xbf16>, vector<64x128xf32> -> vector<64x128xf32>
    %75 = arith.addf %66, %74 : vector<64x128xf32>
    %c10_i32 = arith.constant 10 : i32
    %76 = arith.addi %2, %c10_i32 : i32
    %c0_46 = arith.constant 0 : index
    %77 = arith.index_cast %76 : i32 to index
    %c0_47 = arith.constant 0 : index
    %78 = vector.load %arg1[%c0_46, %77, %c0_47] : memref<4x208x4xf32, #tpu.memory_space<vmem>>, vector<1x64x4xf32>
    %79 = vector.shape_cast %78 : vector<1x64x4xf32> to vector<64x4xf32>
    %80 = arith.truncf %79 : vector<64x4xf32> to vector<64x4xbf16>
    %c8 = arith.constant 8 : index
    %c0_48 = arith.constant 0 : index
    %c0_49 = arith.constant 0 : index
    %81 = vector.load %arg2[%c8, %c0_48, %c0_49] : memref<9x4x128xbf16, #tpu.memory_space<vmem>>, vector<1x4x128xbf16>
    %82 = vector.shape_cast %81 : vector<1x4x128xbf16> to vector<4x128xbf16>
    %cst_50 = arith.constant dense<0.000000e+00> : vector<64x128xf32>
    %83 = tpu.matmul %80, %82, %cst_50 {dimension_numbers = #tpu.dot_dimension_numbers<[1], [0], [0], [1], [0, 0, 1, 1], [], []>} : vector<64x4xbf16>, vector<4x128xbf16>, vector<64x128xf32> -> vector<64x128xf32>
    %84 = arith.addf %75, %83 : vector<64x128xf32>
    %c0_51 = arith.constant 0 : index
    %c0_52 = arith.constant 0 : index
    %85 = vector.load %arg3[%c0_51, %c0_52] : memref<1x128xf32, #tpu.memory_space<vmem>>, vector<1x128xf32>
    %86 = vector.broadcast %85 : vector<1x128xf32> to vector<64x128xf32>
    %87 = arith.addf %84, %86 : vector<64x128xf32>
    %cst_53 = arith.constant 0.000000e+00 : f32
    %88 = vector.broadcast %cst_53 : f32 to vector<64x128xf32>
    %89 = arith.maximumf %87, %88 : vector<64x128xf32>
    %90 = arith.truncf %89 : vector<64x128xf32> to vector<64x128xbf16>
    %c0_54 = arith.constant 0 : index
    %c0_55 = arith.constant 0 : index
    %91 = vector.load %arg4[%c0_54, %c0_55] : memref<64x128xbf16, #tpu.memory_space<vmem>>, vector<64x128xbf16>
    tpu.vector_store %arg4[%c0_54, %c0_55], %90 {strides = array<i32>} : memref<64x128xbf16, #tpu.memory_space<vmem>>, vector<64x128xbf16>,
    return
  }
  func.func @transform_0(%arg0: i32) -> (i32, i32, i32) {
    %c0_i32 = arith.constant 0 : i32
    %c0_i32_0 = arith.constant 0 : i32
    %c0_i32_1 = arith.constant 0 : i32
    %c0_i32_2 = arith.constant 0 : i32
    return %c0_i32, %c0_i32_0, %c0_i32_1 : i32, i32, i32
  }
  func.func @transform_1(%arg0: i32) -> (i32, i32, i32) {
    %c0_i32 = arith.constant 0 : i32
    %c0_i32_0 = arith.constant 0 : i32
    %c0_i32_1 = arith.constant 0 : i32
    %c0_i32_2 = arith.constant 0 : i32
    return %c0_i32, %c0_i32_0, %c0_i32_1 : i32, i32, i32
  }
  func.func @transform_2(%arg0: i32) -> (i32, i32) {
    %c0_i32 = arith.constant 0 : i32
    %c0_i32_0 = arith.constant 0 : i32
    %c0_i32_1 = arith.constant 0 : i32
    return %c0_i32, %c0_i32_0 : i32, i32
  }
  func.func @transform_3(%arg0: i32) -> (i32, i32) {
    %c0_i32 = arith.constant 0 : i32
    %c0_i32_0 = arith.constant 0 : i32
    return %arg0, %c0_i32 : i32, i32
  }
}

module attributes {stable_mosaic.version = 11 : i64} {
  func.func @_shift_conv_kernel(%arg0: i32, %arg1: memref<1x280x128xf32, #tpu.memory_space<vmem>>, %arg2: memref<9x128x128xbf16, #tpu.memory_space<vmem>>, %arg3: memref<1x128xf32, #tpu.memory_space<vmem>>, %arg4: memref<64x4xbf16, #tpu.memory_space<vmem>>, %arg5: memref<4x128xbf16, #tpu.memory_space<vmem>>, %arg6: memref<1x128xf32, #tpu.memory_space<vmem>>, %arg7: memref<64x128xf32, #tpu.memory_space<vmem>>) attributes {dimension_semantics = [#tpu.dimension_semantics<parallel>], iteration_bounds = array<i64: 4>, scalar_prefetch = 0 : i64, scratch_operands = 0 : i64, tpu.core_type = #tpu.core_type<tc>, window_params = [{pipeline_mode = #tpu.pipeline_mode<synchronous>, transform_indices = @transform_0, window_bounds = array<i64: 1, 280, 128>}, {pipeline_mode = #tpu.pipeline_mode<synchronous>, transform_indices = @transform_1, window_bounds = array<i64: 9, 128, 128>}, {pipeline_mode = #tpu.pipeline_mode<synchronous>, transform_indices = @transform_2, window_bounds = array<i64: 1, 128>}, {transform_indices = @transform_3, window_bounds = array<i64: 64, 4>}, {pipeline_mode = #tpu.pipeline_mode<synchronous>, transform_indices = @transform_4, window_bounds = array<i64: 4, 128>}, {pipeline_mode = #tpu.pipeline_mode<synchronous>, transform_indices = @transform_5, window_bounds = array<i64: 1, 128>}, {transform_indices = @transform_6, window_bounds = array<i64: 64, 128>}]} {
    %c64_i32 = arith.constant 64 : i32
    %0 = arith.muli %arg0, %c64_i32 : i32
    %1 = tpu.assume_multiple %0, 64 : i32
    %c11_i32 = arith.constant 11 : i32
    %2 = arith.addi %1, %c11_i32 : i32
    %cst = arith.constant 0.000000e+00 : f32
    %3 = vector.broadcast %cst : f32 to vector<64x128xf32>
    %c-11_i32 = arith.constant -11 : i32
    %4 = arith.addi %2, %c-11_i32 : i32
    %c0 = arith.constant 0 : index
    %5 = arith.index_cast %4 : i32 to index
    %c0_0 = arith.constant 0 : index
    %6 = vector.load %arg1[%c0, %5, %c0_0] : memref<1x280x128xf32, #tpu.memory_space<vmem>>, vector<1x64x128xf32>
    %7 = vector.shape_cast %6 : vector<1x64x128xf32> to vector<64x128xf32>
    %8 = arith.truncf %7 : vector<64x128xf32> to vector<64x128xbf16>
    %c0_1 = arith.constant 0 : index
    %c0_2 = arith.constant 0 : index
    %c0_3 = arith.constant 0 : index
    %9 = vector.load %arg2[%c0_1, %c0_2, %c0_3] : memref<9x128x128xbf16, #tpu.memory_space<vmem>>, vector<1x128x128xbf16>
    %10 = vector.shape_cast %9 : vector<1x128x128xbf16> to vector<128x128xbf16>
    %cst_4 = arith.constant dense<0.000000e+00> : vector<64x128xf32>
    %11 = tpu.matmul %8, %10, %cst_4 {dimension_numbers = #tpu.dot_dimension_numbers<[1], [0], [0], [1], [0, 0, 1, 1], [], []>} : vector<64x128xbf16>, vector<128x128xbf16>, vector<64x128xf32> -> vector<64x128xf32>
    %12 = arith.addf %3, %11 : vector<64x128xf32>
    %c-10_i32 = arith.constant -10 : i32
    %13 = arith.addi %2, %c-10_i32 : i32
    %c0_5 = arith.constant 0 : index
    %14 = arith.index_cast %13 : i32 to index
    %c0_6 = arith.constant 0 : index
    %15 = vector.load %arg1[%c0_5, %14, %c0_6] : memref<1x280x128xf32, #tpu.memory_space<vmem>>, vector<1x64x128xf32>
    %16 = vector.shape_cast %15 : vector<1x64x128xf32> to vector<64x128xf32>
    %17 = arith.truncf %16 : vector<64x128xf32> to vector<64x128xbf16>
    %c1 = arith.constant 1 : index
    %c0_7 = arith.constant 0 : index
    %c0_8 = arith.constant 0 : index
    %18 = vector.load %arg2[%c1, %c0_7, %c0_8] : memref<9x128x128xbf16, #tpu.memory_space<vmem>>, vector<1x128x128xbf16>
    %19 = vector.shape_cast %18 : vector<1x128x128xbf16> to vector<128x128xbf16>
    %cst_9 = arith.constant dense<0.000000e+00> : vector<64x128xf32>
    %20 = tpu.matmul %17, %19, %cst_9 {dimension_numbers = #tpu.dot_dimension_numbers<[1], [0], [0], [1], [0, 0, 1, 1], [], []>} : vector<64x128xbf16>, vector<128x128xbf16>, vector<64x128xf32> -> vector<64x128xf32>
    %21 = arith.addf %12, %20 : vector<64x128xf32>
    %c-9_i32 = arith.constant -9 : i32
    %22 = arith.addi %2, %c-9_i32 : i32
    %c0_10 = arith.constant 0 : index
    %23 = arith.index_cast %22 : i32 to index
    %c0_11 = arith.constant 0 : index
    %24 = vector.load %arg1[%c0_10, %23, %c0_11] : memref<1x280x128xf32, #tpu.memory_space<vmem>>, vector<1x64x128xf32>
    %25 = vector.shape_cast %24 : vector<1x64x128xf32> to vector<64x128xf32>
    %26 = arith.truncf %25 : vector<64x128xf32> to vector<64x128xbf16>
    %c2 = arith.constant 2 : index
    %c0_12 = arith.constant 0 : index
    %c0_13 = arith.constant 0 : index
    %27 = vector.load %arg2[%c2, %c0_12, %c0_13] : memref<9x128x128xbf16, #tpu.memory_space<vmem>>, vector<1x128x128xbf16>
    %28 = vector.shape_cast %27 : vector<1x128x128xbf16> to vector<128x128xbf16>
    %cst_14 = arith.constant dense<0.000000e+00> : vector<64x128xf32>
    %29 = tpu.matmul %26, %28, %cst_14 {dimension_numbers = #tpu.dot_dimension_numbers<[1], [0], [0], [1], [0, 0, 1, 1], [], []>} : vector<64x128xbf16>, vector<128x128xbf16>, vector<64x128xf32> -> vector<64x128xf32>
    %30 = arith.addf %21, %29 : vector<64x128xf32>
    %c-1_i32 = arith.constant -1 : i32
    %31 = arith.addi %2, %c-1_i32 : i32
    %c0_15 = arith.constant 0 : index
    %32 = arith.index_cast %31 : i32 to index
    %c0_16 = arith.constant 0 : index
    %33 = vector.load %arg1[%c0_15, %32, %c0_16] : memref<1x280x128xf32, #tpu.memory_space<vmem>>, vector<1x64x128xf32>
    %34 = vector.shape_cast %33 : vector<1x64x128xf32> to vector<64x128xf32>
    %35 = arith.truncf %34 : vector<64x128xf32> to vector<64x128xbf16>
    %c3 = arith.constant 3 : index
    %c0_17 = arith.constant 0 : index
    %c0_18 = arith.constant 0 : index
    %36 = vector.load %arg2[%c3, %c0_17, %c0_18] : memref<9x128x128xbf16, #tpu.memory_space<vmem>>, vector<1x128x128xbf16>
    %37 = vector.shape_cast %36 : vector<1x128x128xbf16> to vector<128x128xbf16>
    %cst_19 = arith.constant dense<0.000000e+00> : vector<64x128xf32>
    %38 = tpu.matmul %35, %37, %cst_19 {dimension_numbers = #tpu.dot_dimension_numbers<[1], [0], [0], [1], [0, 0, 1, 1], [], []>} : vector<64x128xbf16>, vector<128x128xbf16>, vector<64x128xf32> -> vector<64x128xf32>
    %39 = arith.addf %30, %38 : vector<64x128xf32>
    %c0_i32 = arith.constant 0 : i32
    %40 = arith.addi %2, %c0_i32 : i32
    %c0_20 = arith.constant 0 : index
    %41 = arith.index_cast %40 : i32 to index
    %c0_21 = arith.constant 0 : index
    %42 = vector.load %arg1[%c0_20, %41, %c0_21] : memref<1x280x128xf32, #tpu.memory_space<vmem>>, vector<1x64x128xf32>
    %43 = vector.shape_cast %42 : vector<1x64x128xf32> to vector<64x128xf32>
    %44 = arith.truncf %43 : vector<64x128xf32> to vector<64x128xbf16>
    %c4 = arith.constant 4 : index
    %c0_22 = arith.constant 0 : index
    %c0_23 = arith.constant 0 : index
    %45 = vector.load %arg2[%c4, %c0_22, %c0_23] : memref<9x128x128xbf16, #tpu.memory_space<vmem>>, vector<1x128x128xbf16>
    %46 = vector.shape_cast %45 : vector<1x128x128xbf16> to vector<128x128xbf16>
    %cst_24 = arith.constant dense<0.000000e+00> : vector<64x128xf32>
    %47 = tpu.matmul %44, %46, %cst_24 {dimension_numbers = #tpu.dot_dimension_numbers<[1], [0], [0], [1], [0, 0, 1, 1], [], []>} : vector<64x128xbf16>, vector<128x128xbf16>, vector<64x128xf32> -> vector<64x128xf32>
    %48 = arith.addf %39, %47 : vector<64x128xf32>
    %c1_i32 = arith.constant 1 : i32
    %49 = arith.addi %2, %c1_i32 : i32
    %c0_25 = arith.constant 0 : index
    %50 = arith.index_cast %49 : i32 to index
    %c0_26 = arith.constant 0 : index
    %51 = vector.load %arg1[%c0_25, %50, %c0_26] : memref<1x280x128xf32, #tpu.memory_space<vmem>>, vector<1x64x128xf32>
    %52 = vector.shape_cast %51 : vector<1x64x128xf32> to vector<64x128xf32>
    %53 = arith.truncf %52 : vector<64x128xf32> to vector<64x128xbf16>
    %c5 = arith.constant 5 : index
    %c0_27 = arith.constant 0 : index
    %c0_28 = arith.constant 0 : index
    %54 = vector.load %arg2[%c5, %c0_27, %c0_28] : memref<9x128x128xbf16, #tpu.memory_space<vmem>>, vector<1x128x128xbf16>
    %55 = vector.shape_cast %54 : vector<1x128x128xbf16> to vector<128x128xbf16>
    %cst_29 = arith.constant dense<0.000000e+00> : vector<64x128xf32>
    %56 = tpu.matmul %53, %55, %cst_29 {dimension_numbers = #tpu.dot_dimension_numbers<[1], [0], [0], [1], [0, 0, 1, 1], [], []>} : vector<64x128xbf16>, vector<128x128xbf16>, vector<64x128xf32> -> vector<64x128xf32>
    %57 = arith.addf %48, %56 : vector<64x128xf32>
    %c9_i32 = arith.constant 9 : i32
    %58 = arith.addi %2, %c9_i32 : i32
    %c0_30 = arith.constant 0 : index
    %59 = arith.index_cast %58 : i32 to index
    %c0_31 = arith.constant 0 : index
    %60 = vector.load %arg1[%c0_30, %59, %c0_31] : memref<1x280x128xf32, #tpu.memory_space<vmem>>, vector<1x64x128xf32>
    %61 = vector.shape_cast %60 : vector<1x64x128xf32> to vector<64x128xf32>
    %62 = arith.truncf %61 : vector<64x128xf32> to vector<64x128xbf16>
    %c6 = arith.constant 6 : index
    %c0_32 = arith.constant 0 : index
    %c0_33 = arith.constant 0 : index
    %63 = vector.load %arg2[%c6, %c0_32, %c0_33] : memref<9x128x128xbf16, #tpu.memory_space<vmem>>, vector<1x128x128xbf16>
    %64 = vector.shape_cast %63 : vector<1x128x128xbf16> to vector<128x128xbf16>
    %cst_34 = arith.constant dense<0.000000e+00> : vector<64x128xf32>
    %65 = tpu.matmul %62, %64, %cst_34 {dimension_numbers = #tpu.dot_dimension_numbers<[1], [0], [0], [1], [0, 0, 1, 1], [], []>} : vector<64x128xbf16>, vector<128x128xbf16>, vector<64x128xf32> -> vector<64x128xf32>
    %66 = arith.addf %57, %65 : vector<64x128xf32>
    %c10_i32 = arith.constant 10 : i32
    %67 = arith.addi %2, %c10_i32 : i32
    %c0_35 = arith.constant 0 : index
    %68 = arith.index_cast %67 : i32 to index
    %c0_36 = arith.constant 0 : index
    %69 = vector.load %arg1[%c0_35, %68, %c0_36] : memref<1x280x128xf32, #tpu.memory_space<vmem>>, vector<1x64x128xf32>
    %70 = vector.shape_cast %69 : vector<1x64x128xf32> to vector<64x128xf32>
    %71 = arith.truncf %70 : vector<64x128xf32> to vector<64x128xbf16>
    %c7 = arith.constant 7 : index
    %c0_37 = arith.constant 0 : index
    %c0_38 = arith.constant 0 : index
    %72 = vector.load %arg2[%c7, %c0_37, %c0_38] : memref<9x128x128xbf16, #tpu.memory_space<vmem>>, vector<1x128x128xbf16>
    %73 = vector.shape_cast %72 : vector<1x128x128xbf16> to vector<128x128xbf16>
    %cst_39 = arith.constant dense<0.000000e+00> : vector<64x128xf32>
    %74 = tpu.matmul %71, %73, %cst_39 {dimension_numbers = #tpu.dot_dimension_numbers<[1], [0], [0], [1], [0, 0, 1, 1], [], []>} : vector<64x128xbf16>, vector<128x128xbf16>, vector<64x128xf32> -> vector<64x128xf32>
    %75 = arith.addf %66, %74 : vector<64x128xf32>
    %c11_i32_40 = arith.constant 11 : i32
    %76 = arith.addi %2, %c11_i32_40 : i32
    %c0_41 = arith.constant 0 : index
    %77 = arith.index_cast %76 : i32 to index
    %c0_42 = arith.constant 0 : index
    %78 = vector.load %arg1[%c0_41, %77, %c0_42] : memref<1x280x128xf32, #tpu.memory_space<vmem>>, vector<1x64x128xf32>
    %79 = vector.shape_cast %78 : vector<1x64x128xf32> to vector<64x128xf32>
    %80 = arith.truncf %79 : vector<64x128xf32> to vector<64x128xbf16>
    %c8 = arith.constant 8 : index
    %c0_43 = arith.constant 0 : index
    %c0_44 = arith.constant 0 : index
    %81 = vector.load %arg2[%c8, %c0_43, %c0_44] : memref<9x128x128xbf16, #tpu.memory_space<vmem>>, vector<1x128x128xbf16>
    %82 = vector.shape_cast %81 : vector<1x128x128xbf16> to vector<128x128xbf16>
    %cst_45 = arith.constant dense<0.000000e+00> : vector<64x128xf32>
    %83 = tpu.matmul %80, %82, %cst_45 {dimension_numbers = #tpu.dot_dimension_numbers<[1], [0], [0], [1], [0, 0, 1, 1], [], []>} : vector<64x128xbf16>, vector<128x128xbf16>, vector<64x128xf32> -> vector<64x128xf32>
    %84 = arith.addf %75, %83 : vector<64x128xf32>
    %c0_46 = arith.constant 0 : index
    %c0_47 = arith.constant 0 : index
    %85 = vector.load %arg3[%c0_46, %c0_47] : memref<1x128xf32, #tpu.memory_space<vmem>>, vector<1x128xf32>
    %86 = vector.broadcast %85 : vector<1x128xf32> to vector<64x128xf32>
    %87 = arith.addf %84, %86 : vector<64x128xf32>
    %c0_48 = arith.constant 0 : index
    %c0_49 = arith.constant 0 : index
    %88 = vector.load %arg4[%c0_48, %c0_49] : memref<64x4xbf16, #tpu.memory_space<vmem>>, vector<64x4xbf16>
    %c0_50 = arith.constant 0 : index
    %c0_51 = arith.constant 0 : index
    %89 = vector.load %arg5[%c0_50, %c0_51] : memref<4x128xbf16, #tpu.memory_space<vmem>>, vector<4x128xbf16>
    %cst_52 = arith.constant dense<0.000000e+00> : vector<64x128xf32>
    %90 = tpu.matmul %88, %89, %cst_52 {dimension_numbers = #tpu.dot_dimension_numbers<[1], [0], [0], [1], [0, 0, 1, 1], [], []>} : vector<64x4xbf16>, vector<4x128xbf16>, vector<64x128xf32> -> vector<64x128xf32>
    %91 = arith.addf %87, %90 : vector<64x128xf32>
    %c0_53 = arith.constant 0 : index
    %c0_54 = arith.constant 0 : index
    %92 = vector.load %arg6[%c0_53, %c0_54] : memref<1x128xf32, #tpu.memory_space<vmem>>, vector<1x128xf32>
    %93 = vector.broadcast %92 : vector<1x128xf32> to vector<64x128xf32>
    %94 = arith.addf %91, %93 : vector<64x128xf32>
    %cst_55 = arith.constant 0.000000e+00 : f32
    %95 = vector.broadcast %cst_55 : f32 to vector<64x128xf32>
    %96 = arith.maximumf %94, %95 : vector<64x128xf32>
    %c0_56 = arith.constant 0 : index
    %c0_57 = arith.constant 0 : index
    %97 = vector.load %arg7[%c0_56, %c0_57] : memref<64x128xf32, #tpu.memory_space<vmem>>, vector<64x128xf32>
    tpu.vector_store %arg7[%c0_56, %c0_57], %96 {strides = array<i32>} : memref<64x128xf32, #tpu.memory_space<vmem>>, vector<64x128xf32>,
    return
  }
  func.func @transform_0(%arg0: i32) -> (i32, i32, i32) {
    %c0_i32 = arith.constant 0 : i32
    %c0_i32_0 = arith.constant 0 : i32
    %c0_i32_1 = arith.constant 0 : i32
    %c0_i32_2 = arith.constant 0 : i32
    return %c0_i32, %c0_i32_0, %c0_i32_1 : i32, i32, i32
  }
  func.func @transform_1(%arg0: i32) -> (i32, i32, i32) {
    %c0_i32 = arith.constant 0 : i32
    %c0_i32_0 = arith.constant 0 : i32
    %c0_i32_1 = arith.constant 0 : i32
    %c0_i32_2 = arith.constant 0 : i32
    return %c0_i32, %c0_i32_0, %c0_i32_1 : i32, i32, i32
  }
  func.func @transform_2(%arg0: i32) -> (i32, i32) {
    %c0_i32 = arith.constant 0 : i32
    %c0_i32_0 = arith.constant 0 : i32
    %c0_i32_1 = arith.constant 0 : i32
    return %c0_i32, %c0_i32_0 : i32, i32
  }
  func.func @transform_3(%arg0: i32) -> (i32, i32) {
    %c0_i32 = arith.constant 0 : i32
    %c0_i32_0 = arith.constant 0 : i32
    return %arg0, %c0_i32 : i32, i32
  }
  func.func @transform_4(%arg0: i32) -> (i32, i32) {
    %c0_i32 = arith.constant 0 : i32
    %c0_i32_0 = arith.constant 0 : i32
    %c0_i32_1 = arith.constant 0 : i32
    return %c0_i32, %c0_i32_0 : i32, i32
  }
  func.func @transform_5(%arg0: i32) -> (i32, i32) {
    %c0_i32 = arith.constant 0 : i32
    %c0_i32_0 = arith.constant 0 : i32
    %c0_i32_1 = arith.constant 0 : i32
    return %c0_i32, %c0_i32_0 : i32, i32
  }
  func.func @transform_6(%arg0: i32) -> (i32, i32) {
    %c0_i32 = arith.constant 0 : i32
    %c0_i32_0 = arith.constant 0 : i32
    return %arg0, %c0_i32 : i32, i32
  }
}

</mosaic_0001>

<llo_original>
// kernel: basic_block_forward.2
$region0: #{basic_block_forward.2}
  #allocation0 [shape = 'u32[]', space=smem, size = 0x4, offset = 0x4, fixed_abs, tag = 'smem constant byte address 0x4 - core index']
  #allocation1 [shape = 'u32[72,128]{1,0:T(1,128)}', space=vmem, size = 0x9000, scoped, tag = 'internal scratch']
  %s0 = inlined_call_operand.vmem [shape: f32[4,208,4], index: 0, kind: input, shape index: {}]
  %s1 = inlined_call_operand.vmem [shape: bf16[9,4,128], index: 1, kind: input, shape index: {}]
  %s2 = inlined_call_operand.vmem [shape: f32[1,128], index: 2, kind: input, shape index: {}]
  %s3 = inlined_call_operand.vmem [shape: bf16[192,128], index: 3, kind: output, shape index: {}]
  %s4 = sld [smem:[#allocation0]]
  $region45: #{basic_block_forward.2} parent=0
    _
  %s6 = ssub.s32 1, %s4
  %s7 = scalar_select 0, %s6, %s4
  loop: start=0, step=1, limit=5
  $region2: #{basic_block_forward.2} parent=0 // loop_pre_header
    _
  $region3: #{basic_block_forward.2} parent=0 // loop_header
    %s9 = sphi 0, %s13
    %p10 = scmp.ge.s32.totalorder %s9, 5
    %s17 = sphi 0, %s17
    %s19 = sphi 0, %s17
    %s20 = sphi 0, %s19
    %s34 = sphi 0, %s20
    %s38 = sphi 0, %s38
    %s40 = sphi 0, %s38
    %s41 = sphi 0, %s40
    %s55 = sphi 0, %s41
    %s59 = sphi 0, %s59
    %s61 = sphi 0, %s59
    %s62 = sphi 0, %s61
    %s76 = sphi 0, %s62
    %s82 = sphi 0, %s84
    %s85 = sphi 0, %s82
    %s86 = sphi 0, %s85
    %s102 = sphi 0, %s86
  $region4: #{basic_block_forward.2} parent=0 // loop_header_branch
    %12 = sbr.rel (%p10) target = $region8
  $region5: #{basic_block_forward.2} parent=0 // loop_body
    %s14 = ssub.s32 %s9, 1
    %s15 = ssub.s32 %s9, 2
    %s16 = sadd.s32 %s9, 1
    %s18 = sadd.s32 %s17, 1
    %p21 = scmp.eq.s32.totalorder %s9, 2
    %p22 = scmp.ne.s32.totalorder %s17, %s19
    %p23 = scmp.eq.s32.totalorder %s9, 0
    %p24 = por %p22, %p23
    %p25 = scmp.ne.s32.totalorder %s17, %s19
    %p26 = scmp.eq.s32.totalorder %s14, 2
    %p27 = por %p25, %p26
    %p28 = scmp.ne.s32.totalorder %s19, %s20
    %p29 = scmp.eq.s32.totalorder %s14, 0
    %p30 = por %p28, %p29
    %p31 = scmp.ne.s32.totalorder %s19, %s20
    %p32 = scmp.eq.s32.totalorder %s15, 2
    %p33 = por %p31, %p32
    %p35 = scmp.ne.s32.totalorder %s20, %s34
    %p36 = scmp.eq.s32.totalorder %s15, 0
    %p37 = por %p35, %p36
    %s39 = sadd.s32 %s38, 1
    %p42 = scmp.eq.s32.totalorder %s9, 2
    %p43 = scmp.ne.s32.totalorder %s38, %s40
    %p44 = scmp.eq.s32.totalorder %s9, 0
    %p45 = por %p43, %p44
    %p46 = scmp.ne.s32.totalorder %s38, %s40
    %p47 = scmp.eq.s32.totalorder %s14, 2
    %p48 = por %p46, %p47
    %p49 = scmp.ne.s32.totalorder %s40, %s41
    %p50 = scmp.eq.s32.totalorder %s14, 0
    %p51 = por %p49, %p50
    %p52 = scmp.ne.s32.totalorder %s40, %s41
    %p53 = scmp.eq.s32.totalorder %s15, 2
    %p54 = por %p52, %p53
    %p56 = scmp.ne.s32.totalorder %s41, %s55
    %p57 = scmp.eq.s32.totalorder %s15, 0
    %p58 = por %p56, %p57
    %s60 = sadd.s32 %s59, 1
    %p63 = scmp.eq.s32.totalorder %s9, 2
    %p64 = scmp.ne.s32.totalorder %s59, %s61
    %p65 = scmp.eq.s32.totalorder %s9, 0
    %p66 = por %p64, %p65
    %p67 = scmp.ne.s32.totalorder %s59, %s61
    %p68 = scmp.eq.s32.totalorder %s14, 2
    %p69 = por %p67, %p68
    %p70 = scmp.ne.s32.totalorder %s61, %s62
    %p71 = scmp.eq.s32.totalorder %s14, 0
    %p72 = por %p70, %p71
    %p73 = scmp.ne.s32.totalorder %s61, %s62
    %p74 = scmp.eq.s32.totalorder %s15, 2
    %p75 = por %p73, %p74
    %p77 = scmp.ne.s32.totalorder %s62, %s76
    %p78 = scmp.eq.s32.totalorder %s15, 0
    %p79 = por %p77, %p78
    %s80 = ssub.s32 %s9, %s16
    %p81 = scmp.eq.s32.totalorder %s80, 0
    %s83 = sadd.s32 %s82, 1
    %s84 = scalar_select %p81, %s82, %s83
    %p87 = pneg %p81
    %p88 = scmp.eq.s32.totalorder %s9, 2
    %p89 = por %p87, %p88
    %p90 = scmp.ne.s32.totalorder %s82, %s85
    %p91 = scmp.eq.s32.totalorder %s9, 0
    %p92 = por %p90, %p91
    %p93 = scmp.ne.s32.totalorder %s82, %s85
    %p94 = scmp.eq.s32.totalorder %s14, 2
    %p95 = por %p93, %p94
    %p96 = scmp.ne.s32.totalorder %s85, %s86
    %p97 = scmp.eq.s32.totalorder %s14, 0
    %p98 = por %p96, %p97
    %p99 = scmp.ne.s32.totalorder %s85, %s86
    %p100 = scmp.eq.s32.totalorder %s15, 2
    %p101 = por %p99, %p100
    %p103 = scmp.ne.s32.totalorder %s86, %s102
    %p104 = scmp.eq.s32.totalorder %s15, 0
    %p105 = por %p103, %p104
    %p106 = scmp.le.s32.totalorder 1, %s9
    %p107 = scmp.lt.s32.totalorder %s9, 4
    %p108 = pnand %p106, %p107
    %p109 = pneg %p108
    // Predicated region
    $region9: #{basic_block_forward.2} parent=5 // pred_check
      _
    $region10: #{basic_block_forward.2} parent=5 // pred_check_branch
      %111 = sbr.rel (%p108) target = $region12
    $region11: #{basic_block_forward.2} parent=5 // pred_region
      %s112 = ssub.s32 %s9, 1
      // Predicated region
      $region13: #{basic_block_forward.2} parent=11 // pred_check
        %p113 = pneg %p30
      $region14: #{basic_block_forward.2} parent=11 // pred_check_branch
        %115 = sbr.rel (%p113) target = $region16
      $region15: #{basic_block_forward.2} parent=11 // pred_region
        _
      $region16: #{basic_block_forward.2} parent=11 // pred_fallthru
        _
      // Predicated region
      $region17: #{basic_block_forward.2} parent=11 // pred_check
        %p116 = pneg %p51
      $region18: #{basic_block_forward.2} parent=11 // pred_check_branch
        %118 = sbr.rel (%p116) target = $region20
      $region19: #{basic_block_forward.2} parent=11 // pred_region
        _
      $region20: #{basic_block_forward.2} parent=11 // pred_fallthru
        _
      // Predicated region
      $region21: #{basic_block_forward.2} parent=11 // pred_check
        %p119 = pneg %p72
      $region22: #{basic_block_forward.2} parent=11 // pred_check_branch
        %121 = sbr.rel (%p119) target = $region24
      $region23: #{basic_block_forward.2} parent=11 // pred_region
        _
      $region24: #{basic_block_forward.2} parent=11 // pred_fallthru
        _
    $region12: #{basic_block_forward.2} parent=5 // pred_fallthru
      _
    %p122 = scmp.lt.s32.totalorder %s9, 3
    // Predicated region
    $region25: #{basic_block_forward.2} parent=5 // pred_check
      %p123 = pneg %p122
    $region26: #{basic_block_forward.2} parent=5 // pred_check_branch
      %125 = sbr.rel (%p123) target = $region28
    $region27: #{basic_block_forward.2} parent=5 // pred_region
      _
    $region28: #{basic_block_forward.2} parent=5 // pred_fallthru
      _
    %p126 = scmp.le.s32.totalorder 1, %s9
    %p127 = scmp.lt.s32.totalorder %s9, 4
    %p128 = pnand %p126, %p127
    %p129 = pneg %p128
    // Predicated region
    $region29: #{basic_block_forward.2} parent=5 // pred_check
      _
    $region30: #{basic_block_forward.2} parent=5 // pred_check_branch
      %131 = sbr.rel (%p128) target = $region32
    $region31: #{basic_block_forward.2} parent=5 // pred_region
      %s132 = ssub.s32 %s9, 1
      %p133 = pneg %p30
      %p134 = pneg %p27
      %p135 = pneg %p51
      %p136 = pneg %p48
      %p137 = pneg %p72
      %p138 = pneg %p69
      %p139 = pneg %p98
      %p140 = pneg %p95
      %s141 = smul.u32 8, %s14
      %p142 = scmp.lt.s32.totalorder %s141, 23
      %s143 = scalar_select %p142, %s141, 23
      %s144 = smul.addr %s143, 4
      %s145 = scalar_lea.vmem %s3, %s144
      %s146 = smul.u32 8, %s14
      %p147 = scmp.lt.s32.totalorder %s146, 23
      %s148 = scalar_select %p147, %s146, 23
      %s149 = smul.addr %s148, 4
      %s150 = scalar_lea.vmem %s3, %s149
      %s151 = smul.u32 8, %s14
      %s153 = smul.u32 %s14, 64
      %s154 = scalar_lea.vmem %s0, %s153
      %v155 = vld [vmem:[%s154] sm:$0xff]
      %v156 = vld [vmem:[%s154 + $0x8] sm:$0xff]
      %v157 = vld [vmem:[%s154 + $0x10] sm:$0xff]
      %v158 = vld [vmem:[%s154 + $0x18] sm:$0xff]
      %v159 = vld [vmem:[%s154 + $0x20] sm:$0xff]
      %v160 = vld [vmem:[%s154 + $0x28] sm:$0xff]
      %v161 = vld [vmem:[%s154 + $0x30] sm:$0xff]
      %v162 = vld [vmem:[%s154 + $0x38] sm:$0xff]
      %v163 = vpack.c.bf16 %v156, %v155
      %v164 = vpack.c.bf16 %v158, %v157
      %v165 = vpack.c.bf16 %v160, %v159
      %v166 = vpack.c.bf16 %v162, %v161
      %v167 = vld [vmem:[%s1] sm:$0x3]
      %s168 = sadd.s32 %s153, 208
      %s169 = scalar_lea.vmem %s0, %s168
      %v170 = vld [vmem:[%s169] sm:$0xff]
      %v171 = vld [vmem:[%s169 + $0x8] sm:$0xff]
      %v172 = vld [vmem:[%s169 + $0x10] sm:$0xff]
      %v173 = vld [vmem:[%s169 + $0x18] sm:$0xff]
      %v174 = vld [vmem:[%s169 + $0x20] sm:$0xff]
      %v175 = vld [vmem:[%s169 + $0x28] sm:$0xff]
      %v176 = vld [vmem:[%s169 + $0x30] sm:$0xff]
      %v177 = vld [vmem:[%s169 + $0x38] sm:$0xff]
      %v178 = vpack.c.bf16 %v171, %v170
      %v179 = vpack.c.bf16 %v173, %v172
      %v180 = vpack.c.bf16 %v175, %v174
      %v181 = vpack.c.bf16 %v177, %v176
      %s182 = scalar_lea.vmem %s1, 2
      %v183 = vld [vmem:[%s182] sm:$0x3]
      %vm184 = vcmask 31744
      %v186 = vsel %vm184, %v178, 0
      %v189 = vsel %vm184, %v179, 0
      %v192 = vsel %vm184, %v180, 0
      %v195 = vsel %vm184, %v181, 0
      %vm197 = vcmask 1041408
      %v199 = vsel %vm197, %v183, 0
      %201 = vmatpush.bf16.msra.mxu0 0
      %202 = vmatpush.bf16.msra.mxu0 0
      %203 = vmatpush.bf16.msra.mxu0 0
      %204 = vmatpush.bf16.msra.mxu0 0
      %205 = vmatpush.bf16.msra.mxu0 0
      %206 = vmatpush.bf16.msra.mxu0 0
      %207 = vmatpush.bf16.msra.mxu0 0
      %208 = vmatpush.bf16.msra.mxu0 %v199
      %209 = vmatmul.bf16.gmra.mxu0 %v186
      %v210 = vpop.f32.mrf.mxu0
      %v211 = vadd.f32 0.0, %v210
      %v212 = vpop.f32.mrf.mxu0
      %v213 = vadd.f32 0.0, %v212
      %214 = vmatmul.bf16.gmra.mxu0 %v189
      %v215 = vpop.f32.mrf.mxu0
      %v216 = vadd.f32 0.0, %v215
      %v217 = vpop.f32.mrf.mxu0
      %v218 = vadd.f32 0.0, %v217
      %219 = vmatmul.bf16.gmra.mxu0 %v192
      %v220 = vpop.f32.mrf.mxu0
      %v221 = vadd.f32 0.0, %v220
      %v222 = vpop.f32.mrf.mxu0
      %v223 = vadd.f32 0.0, %v222
      %224 = vmatmul.bf16.gmra.mxu0 %v195
      %v225 = vpop.f32.mrf.mxu0
      %v226 = vadd.f32 0.0, %v225
      %v227 = vpop.f32.mrf.mxu0
      %v228 = vadd.f32 0.0, %v227
      %229 = vdwg.mxu0
      %v231 = vsel %vm184, %v163, 0
      %v234 = vsel %vm184, %v164, 0
      %v237 = vsel %vm184, %v165, 0
      %v240 = vsel %vm184, %v166, 0
      %v243 = vsel %vm197, %v167, 0
      %245 = vmatpush.bf16.msra.mxu0 0
      %246 = vmatpush.bf16.msra.mxu0 0
      %247 = vmatpush.bf16.msra.mxu0 0
      %248 = vmatpush.bf16.msra.mxu0 0
      %249 = vmatpush.bf16.msra.mxu0 0
      %250 = vmatpush.bf16.msra.mxu0 0
      %251 = vmatpush.bf16.msra.mxu0 0
      %252 = vmatpush.bf16.msra.mxu0 %v243
      %253 = vmatmul.bf16.gmra.mxu0 %v231
      %v254 = vpop.f32.mrf.mxu0
      %v255 = vadd.f32 %v211, %v254
      %v256 = vpop.f32.mrf.mxu0
      %v257 = vadd.f32 %v213, %v256
      %258 = vmatmul.bf16.gmra.mxu0 %v234
      %v259 = vpop.f32.mrf.mxu0
      %v260 = vadd.f32 %v216, %v259
      %v261 = vpop.f32.mrf.mxu0
      %v262 = vadd.f32 %v218, %v261
      %263 = vmatmul.bf16.gmra.mxu0 %v237
      %v264 = vpop.f32.mrf.mxu0
      %v265 = vadd.f32 %v221, %v264
      %v266 = vpop.f32.mrf.mxu0
      %v267 = vadd.f32 %v223, %v266
      %268 = vmatmul.bf16.gmra.mxu0 %v240
      %v269 = vpop.f32.mrf.mxu0
      %v270 = vadd.f32 %v226, %v269
      %v271 = vpop.f32.mrf.mxu0
      %v272 = vadd.f32 %v228, %v271
      %273 = vdwg.mxu0
      %s274 = sadd.s32 %s153, 1
      %s275 = scalar_lea.vmem %s0, %s274
      %v276 = vld [vmem:[%s275] sm:$0xff]
      %v277 = vld [vmem:[%s275 + $0x8] sm:$0xff]
      %v278 = vld [vmem:[%s275 + $0x10] sm:$0xff]
      %v279 = vld [vmem:[%s275 + $0x18] sm:$0xff]
      %v280 = vld [vmem:[%s275 + $0x20] sm:$0xff]
      %v281 = vld [vmem:[%s275 + $0x28] sm:$0xff]
      %v282 = vld [vmem:[%s275 + $0x30] sm:$0xff]
      %v283 = vld [vmem:[%s275 + $0x38] sm:$0xff]
      %v284 = vpack.c.bf16 %v277, %v276
      %v285 = vpack.c.bf16 %v279, %v278
      %v286 = vpack.c.bf16 %v281, %v280
      %v287 = vpack.c.bf16 %v283, %v282
      %s288 = scalar_lea.vmem %s1, 4
      %v289 = vld [vmem:[%s288] sm:$0x3]
      %v291 = vsel %vm184, %v284, 0
      %v294 = vsel %vm184, %v285, 0
      %v297 = vsel %vm184, %v286, 0
      %v300 = vsel %vm184, %v287, 0
      %v303 = vsel %vm197, %v289, 0
      %305 = vmatpush.bf16.msra.mxu0 0
      %306 = vmatpush.bf16.msra.mxu0 0
      %307 = vmatpush.bf16.msra.mxu0 0
      %308 = vmatpush.bf16.msra.mxu0 0
      %309 = vmatpush.bf16.msra.mxu0 0
      %310 = vmatpush.bf16.msra.mxu0 0
      %311 = vmatpush.bf16.msra.mxu0 0
      %312 = vmatpush.bf16.msra.mxu0 %v303
      %313 = vmatmul.bf16.gmra.mxu0 %v291
      %v314 = vpop.f32.mrf.mxu0
      %v315 = vadd.f32 0.0, %v314
      %v316 = vpop.f32.mrf.mxu0
      %v317 = vadd.f32 0.0, %v316
      %318 = vmatmul.bf16.gmra.mxu0 %v294
      %v319 = vpop.f32.mrf.mxu0
      %v320 = vadd.f32 0.0, %v319
      %v321 = vpop.f32.mrf.mxu0
      %v322 = vadd.f32 0.0, %v321
      %323 = vmatmul.bf16.gmra.mxu0 %v297
      %v324 = vpop.f32.mrf.mxu0
      %v325 = vadd.f32 0.0, %v324
      %v326 = vpop.f32.mrf.mxu0
      %v327 = vadd.f32 0.0, %v326
      %328 = vmatmul.bf16.gmra.mxu0 %v300
      %v329 = vpop.f32.mrf.mxu0
      %v330 = vadd.f32 0.0, %v329
      %v331 = vpop.f32.mrf.mxu0
      %v332 = vadd.f32 0.0, %v331
      %333 = vdwg.mxu0
      %v334 = vadd.f32 %v255, %v315
      %v335 = vadd.f32 %v257, %v317
      %v336 = vadd.f32 %v260, %v320
      %v337 = vadd.f32 %v262, %v322
      %v338 = vadd.f32 %v265, %v325
      %v339 = vadd.f32 %v267, %v327
      %v340 = vadd.f32 %v270, %v330
      %v341 = vadd.f32 %v272, %v332
      %s342 = sadd.s32 %s153, 416
      %s343 = scalar_lea.vmem %s0, %s342
      %v344 = vld [vmem:[%s343] sm:$0xff]
      %v345 = vld [vmem:[%s343 + $0x8] sm:$0xff]
      %v346 = vld [vmem:[%s343 + $0x10] sm:$0xff]
      %v347 = vld [vmem:[%s343 + $0x18] sm:$0xff]
      %v348 = vld [vmem:[%s343 + $0x20] sm:$0xff]
      %v349 = vld [vmem:[%s343 + $0x28] sm:$0xff]
      %v350 = vld [vmem:[%s343 + $0x30] sm:$0xff]
      %v351 = vld [vmem:[%s343 + $0x38] sm:$0xff]
      %v352 = vpack.c.bf16 %v345, %v344
      %v353 = vpack.c.bf16 %v347, %v346
      %v354 = vpack.c.bf16 %v349, %v348
      %v355 = vpack.c.bf16 %v351, %v350
      %s356 = scalar_lea.vmem %s1, 6
      %v357 = vld [vmem:[%s356] sm:$0x3]
      %v359 = vsel %vm184, %v352, 0
      %v362 = vsel %vm184, %v353, 0
      %v365 = vsel %vm184, %v354, 0
      %v368 = vsel %vm184, %v355, 0
      %v371 = vsel %vm197, %v357, 0
      %373 = vmatpush.bf16.msra.mxu0 0
      %374 = vmatpush.bf16.msra.mxu0 0
      %375 = vmatpush.bf16.msra.mxu0 0
      %376 = vmatpush.bf16.msra.mxu0 0
      %377 = vmatpush.bf16.msra.mxu0 0
      %378 = vmatpush.bf16.msra.mxu0 0
      %379 = vmatpush.bf16.msra.mxu0 0
      %380 = vmatpush.bf16.msra.mxu0 %v371
      %381 = vmatmul.bf16.gmra.mxu0 %v359
      %v382 = vpop.f32.mrf.mxu0
      %v383 = vadd.f32 0.0, %v382
      %v384 = vpop.f32.mrf.mxu0
      %v385 = vadd.f32 0.0, %v384
      %386 = vmatmul.bf16.gmra.mxu0 %v362
      %v387 = vpop.f32.mrf.mxu0
      %v388 = vadd.f32 0.0, %v387
      %v389 = vpop.f32.mrf.mxu0
      %v390 = vadd.f32 0.0, %v389
      %391 = vmatmul.bf16.gmra.mxu0 %v365
      %v392 = vpop.f32.mrf.mxu0
      %v393 = vadd.f32 0.0, %v392
      %v394 = vpop.f32.mrf.mxu0
      %v395 = vadd.f32 0.0, %v394
      %396 = vmatmul.bf16.gmra.mxu0 %v368
      %v397 = vpop.f32.mrf.mxu0
      %v398 = vadd.f32 0.0, %v397
      %v399 = vpop.f32.mrf.mxu0
      %v400 = vadd.f32 0.0, %v399
      %401 = vdwg.mxu0
      %v402 = vadd.f32 %v334, %v383
      %v403 = vadd.f32 %v335, %v385
      %v404 = vadd.f32 %v336, %v388
      %v405 = vadd.f32 %v337, %v390
      %v406 = vadd.f32 %v338, %v393
      %v407 = vadd.f32 %v339, %v395
      %v408 = vadd.f32 %v340, %v398
      %v409 = vadd.f32 %v341, %v400
      %s410 = sadd.s32 %s153, 624
      %s411 = scalar_lea.vmem %s0, %s410
      %v412 = vld [vmem:[%s411] sm:$0xff]
      %v413 = vld [vmem:[%s411 + $0x8] sm:$0xff]
      %v414 = vld [vmem:[%s411 + $0x10] sm:$0xff]
      %v415 = vld [vmem:[%s411 + $0x18] sm:$0xff]
      %v416 = vld [vmem:[%s411 + $0x20] sm:$0xff]
      %v417 = vld [vmem:[%s411 + $0x28] sm:$0xff]
      %v418 = vld [vmem:[%s411 + $0x30] sm:$0xff]
      %v419 = vld [vmem:[%s411 + $0x38] sm:$0xff]
      %v420 = vpack.c.bf16 %v413, %v412
      %v421 = vpack.c.bf16 %v415, %v414
      %v422 = vpack.c.bf16 %v417, %v416
      %v423 = vpack.c.bf16 %v419, %v418
      %s424 = scalar_lea.vmem %s1, 8
      %v425 = vld [vmem:[%s424] sm:$0x3]
      %v427 = vsel %vm184, %v420, 0
      %v430 = vsel %vm184, %v421, 0
      %v433 = vsel %vm184, %v422, 0
      %v436 = vsel %vm184, %v423, 0
      %v439 = vsel %vm197, %v425, 0
      %441 = vmatpush.bf16.msra.mxu0 0
      %442 = vmatpush.bf16.msra.mxu0 0
      %443 = vmatpush.bf16.msra.mxu0 0
      %444 = vmatpush.bf16.msra.mxu0 0
      %445 = vmatpush.bf16.msra.mxu0 0
      %446 = vmatpush.bf16.msra.mxu0 0
      %447 = vmatpush.bf16.msra.mxu0 0
      %448 = vmatpush.bf16.msra.mxu0 %v439
      %449 = vmatmul.bf16.gmra.mxu0 %v427
      %v450 = vpop.f32.mrf.mxu0
      %v451 = vadd.f32 0.0, %v450
      %v452 = vpop.f32.mrf.mxu0
      %v453 = vadd.f32 0.0, %v452
      %454 = vmatmul.bf16.gmra.mxu0 %v430
      %v455 = vpop.f32.mrf.mxu0
      %v456 = vadd.f32 0.0, %v455
      %v457 = vpop.f32.mrf.mxu0
      %v458 = vadd.f32 0.0, %v457
      %459 = vmatmul.bf16.gmra.mxu0 %v433
      %v460 = vpop.f32.mrf.mxu0
      %v461 = vadd.f32 0.0, %v460
      %v462 = vpop.f32.mrf.mxu0
      %v463 = vadd.f32 0.0, %v462
      %464 = vmatmul.bf16.gmra.mxu0 %v436
      %v465 = vpop.f32.mrf.mxu0
      %v466 = vadd.f32 0.0, %v465
      %v467 = vpop.f32.mrf.mxu0
      %v468 = vadd.f32 0.0, %v467
      %469 = vdwg.mxu0
      %v470 = vadd.f32 %v402, %v451
      %v471 = vadd.f32 %v403, %v453
      %v472 = vadd.f32 %v404, %v456
      %v473 = vadd.f32 %v405, %v458
      %v474 = vadd.f32 %v406, %v461
      %v475 = vadd.f32 %v407, %v463
      %v476 = vadd.f32 %v408, %v466
      %v477 = vadd.f32 %v409, %v468
      %s478 = sadd.s32 %s274, 416
      %s479 = scalar_lea.vmem %s0, %s478
      %v480 = vld [vmem:[%s479] sm:$0xff]
      %v481 = vld [vmem:[%s479 + $0x8] sm:$0xff]
      %v482 = vld [vmem:[%s479 + $0x10] sm:$0xff]
      %v483 = vld [vmem:[%s479 + $0x18] sm:$0xff]
      %v484 = vld [vmem:[%s479 + $0x20] sm:$0xff]
      %v485 = vld [vmem:[%s479 + $0x28] sm:$0xff]
      %v486 = vld [vmem:[%s479 + $0x30] sm:$0xff]
      %v487 = vld [vmem:[%s479 + $0x38] sm:$0xff]
      %v488 = vpack.c.bf16 %v481, %v480
      %v489 = vpack.c.bf16 %v483, %v482
      %v490 = vpack.c.bf16 %v485, %v484
      %v491 = vpack.c.bf16 %v487, %v486
      %s492 = scalar_lea.vmem %s1, 10
      %v493 = vld [vmem:[%s492] sm:$0x3]
      %v495 = vsel %vm184, %v488, 0
      %v498 = vsel %vm184, %v489, 0
      %v501 = vsel %vm184, %v490, 0
      %v504 = vsel %vm184, %v491, 0
      %v507 = vsel %vm197, %v493, 0
      %509 = vmatpush.bf16.msra.mxu0 0
      %510 = vmatpush.bf16.msra.mxu0 0
      %511 = vmatpush.bf16.msra.mxu0 0
      %512 = vmatpush.bf16.msra.mxu0 0
      %513 = vmatpush.bf16.msra.mxu0 0
      %514 = vmatpush.bf16.msra.mxu0 0
      %515 = vmatpush.bf16.msra.mxu0 0
      %516 = vmatpush.bf16.msra.mxu0 %v507
      %517 = vmatmul.bf16.gmra.mxu0 %v495
      %v518 = vpop.f32.mrf.mxu0
      %v519 = vadd.f32 0.0, %v518
      %v520 = vpop.f32.mrf.mxu0
      %v521 = vadd.f32 0.0, %v520
      %522 = vmatmul.bf16.gmra.mxu0 %v498
      %v523 = vpop.f32.mrf.mxu0
      %v524 = vadd.f32 0.0, %v523
      %v525 = vpop.f32.mrf.mxu0
      %v526 = vadd.f32 0.0, %v525
      %527 = vmatmul.bf16.gmra.mxu0 %v501
      %v528 = vpop.f32.mrf.mxu0
      %v529 = vadd.f32 0.0, %v528
      %v530 = vpop.f32.mrf.mxu0
      %v531 = vadd.f32 0.0, %v530
      %532 = vmatmul.bf16.gmra.mxu0 %v504
      %v533 = vpop.f32.mrf.mxu0
      %v534 = vadd.f32 0.0, %v533
      %v535 = vpop.f32.mrf.mxu0
      %v536 = vadd.f32 0.0, %v535
      %537 = vdwg.mxu0
      %v538 = vadd.f32 %v470, %v519
      %v539 = vadd.f32 %v471, %v521
      %v540 = vadd.f32 %v472, %v524
      %v541 = vadd.f32 %v473, %v526
      %v542 = vadd.f32 %v474, %v529
      %v543 = vadd.f32 %v475, %v531
      %v544 = vadd.f32 %v476, %v534
      %v545 = vadd.f32 %v477, %v536
      %s546 = sadd.s32 %s153, 9
      %s547 = scalar_lea.vmem %s0, %s546
      %v548 = vld [vmem:[%s547] sm:$0xff]
      %v549 = vld [vmem:[%s547 + $0x8] sm:$0xff]
      %v550 = vld [vmem:[%s547 + $0x10] sm:$0xff]
      %v551 = vld [vmem:[%s547 + $0x18] sm:$0xff]
      %v552 = vld [vmem:[%s547 + $0x20] sm:$0xff]
      %v553 = vld [vmem:[%s547 + $0x28] sm:$0xff]
      %v554 = vld [vmem:[%s547 + $0x30] sm:$0xff]
      %v555 = vld [vmem:[%s547 + $0x38] sm:$0xff]
      %v556 = vpack.c.bf16 %v549, %v548
      %v557 = vpack.c.bf16 %v551, %v550
      %v558 = vpack.c.bf16 %v553, %v552
      %v559 = vpack.c.bf16 %v555, %v554
      %s560 = scalar_lea.vmem %s1, 12
      %v561 = vld [vmem:[%s560] sm:$0x3]
      %v563 = vsel %vm184, %v556, 0
      %v566 = vsel %vm184, %v557, 0
      %v569 = vsel %vm184, %v558, 0
      %v572 = vsel %vm184, %v559, 0
      %v575 = vsel %vm197, %v561, 0
      %577 = vmatpush.bf16.msra.mxu0 0
      %578 = vmatpush.bf16.msra.mxu0 0
      %579 = vmatpush.bf16.msra.mxu0 0
      %580 = vmatpush.bf16.msra.mxu0 0
      %581 = vmatpush.bf16.msra.mxu0 0
      %582 = vmatpush.bf16.msra.mxu0 0
      %583 = vmatpush.bf16.msra.mxu0 0
      %584 = vmatpush.bf16.msra.mxu0 %v575
      %585 = vmatmul.bf16.gmra.mxu0 %v563
      %v586 = vpop.f32.mrf.mxu0
      %v587 = vadd.f32 0.0, %v586
      %v588 = vpop.f32.mrf.mxu0
      %v589 = vadd.f32 0.0, %v588
      %590 = vmatmul.bf16.gmra.mxu0 %v566
      %v591 = vpop.f32.mrf.mxu0
      %v592 = vadd.f32 0.0, %v591
      %v593 = vpop.f32.mrf.mxu0
      %v594 = vadd.f32 0.0, %v593
      %595 = vmatmul.bf16.gmra.mxu0 %v569
      %v596 = vpop.f32.mrf.mxu0
      %v597 = vadd.f32 0.0, %v596
      %v598 = vpop.f32.mrf.mxu0
      %v599 = vadd.f32 0.0, %v598
      %600 = vmatmul.bf16.gmra.mxu0 %v572
      %v601 = vpop.f32.mrf.mxu0
      %v602 = vadd.f32 0.0, %v601
      %v603 = vpop.f32.mrf.mxu0
      %v604 = vadd.f32 0.0, %v603
      %605 = vdwg.mxu0
      %v606 = vadd.f32 %v538, %v587
      %v607 = vadd.f32 %v539, %v589
      %v608 = vadd.f32 %v540, %v592
      %v609 = vadd.f32 %v541, %v594
      %v610 = vadd.f32 %v542, %v597
      %v611 = vadd.f32 %v543, %v599
      %v612 = vadd.f32 %v544, %v602
      %v613 = vadd.f32 %v545, %v604
      %s614 = sadd.s32 %s546, 208
      %s615 = scalar_lea.vmem %s0, %s614
      %v616 = vld [vmem:[%s615] sm:$0xff]
      %v617 = vld [vmem:[%s615 + $0x8] sm:$0xff]
      %v618 = vld [vmem:[%s615 + $0x10] sm:$0xff]
      %v619 = vld [vmem:[%s615 + $0x18] sm:$0xff]
      %v620 = vld [vmem:[%s615 + $0x20] sm:$0xff]
      %v621 = vld [vmem:[%s615 + $0x28] sm:$0xff]
      %v622 = vld [vmem:[%s615 + $0x30] sm:$0xff]
      %v623 = vld [vmem:[%s615 + $0x38] sm:$0xff]
      %v624 = vpack.c.bf16 %v617, %v616
      %v625 = vpack.c.bf16 %v619, %v618
      %v626 = vpack.c.bf16 %v621, %v620
      %v627 = vpack.c.bf16 %v623, %v622
      %s628 = scalar_lea.vmem %s1, 14
      %v629 = vld [vmem:[%s628] sm:$0x3]
      %v631 = vsel %vm184, %v624, 0
      %v634 = vsel %vm184, %v625, 0
      %v637 = vsel %vm184, %v626, 0
      %v640 = vsel %vm184, %v627, 0
      %v643 = vsel %vm197, %v629, 0
      %645 = vmatpush.bf16.msra.mxu0 0
      %646 = vmatpush.bf16.msra.mxu0 0
      %647 = vmatpush.bf16.msra.mxu0 0
      %648 = vmatpush.bf16.msra.mxu0 0
      %649 = vmatpush.bf16.msra.mxu0 0
      %650 = vmatpush.bf16.msra.mxu0 0
      %651 = vmatpush.bf16.msra.mxu0 0
      %652 = vmatpush.bf16.msra.mxu0 %v643
      %653 = vmatmul.bf16.gmra.mxu0 %v631
      %v654 = vpop.f32.mrf.mxu0
      %v655 = vadd.f32 0.0, %v654
      %v656 = vpop.f32.mrf.mxu0
      %v657 = vadd.f32 0.0, %v656
      %658 = vmatmul.bf16.gmra.mxu0 %v634
      %v659 = vpop.f32.mrf.mxu0
      %v660 = vadd.f32 0.0, %v659
      %v661 = vpop.f32.mrf.mxu0
      %v662 = vadd.f32 0.0, %v661
      %663 = vmatmul.bf16.gmra.mxu0 %v637
      %v664 = vpop.f32.mrf.mxu0
      %v665 = vadd.f32 0.0, %v664
      %v666 = vpop.f32.mrf.mxu0
      %v667 = vadd.f32 0.0, %v666
      %668 = vmatmul.bf16.gmra.mxu0 %v640
      %v669 = vpop.f32.mrf.mxu0
      %v670 = vadd.f32 0.0, %v669
      %v671 = vpop.f32.mrf.mxu0
      %v672 = vadd.f32 0.0, %v671
      %673 = vdwg.mxu0
      %v674 = vadd.f32 %v606, %v655
      %v675 = vadd.f32 %v607, %v657
      %v676 = vadd.f32 %v608, %v660
      %v677 = vadd.f32 %v609, %v662
      %v678 = vadd.f32 %v610, %v665
      %v679 = vadd.f32 %v611, %v667
      %v680 = vadd.f32 %v612, %v670
      %v681 = vadd.f32 %v613, %v672
      %s682 = sadd.s32 %s153, 10
      %s683 = scalar_lea.vmem %s0, %s682
      %v684 = vld [vmem:[%s683] sm:$0xff]
      %v685 = vld [vmem:[%s683 + $0x8] sm:$0xff]
      %v686 = vld [vmem:[%s683 + $0x10] sm:$0xff]
      %v687 = vld [vmem:[%s683 + $0x18] sm:$0xff]
      %v688 = vld [vmem:[%s683 + $0x20] sm:$0xff]
      %v689 = vld [vmem:[%s683 + $0x28] sm:$0xff]
      %v690 = vld [vmem:[%s683 + $0x30] sm:$0xff]
      %v691 = vld [vmem:[%s683 + $0x38] sm:$0xff]
      %v692 = vpack.c.bf16 %v685, %v684
      %v693 = vpack.c.bf16 %v687, %v686
      %v694 = vpack.c.bf16 %v689, %v688
      %v695 = vpack.c.bf16 %v691, %v690
      %s696 = scalar_lea.vmem %s1, 16
      %v697 = vld [vmem:[%s696] sm:$0x3]
      %v699 = vsel %vm184, %v692, 0
      %v702 = vsel %vm184, %v693, 0
      %v705 = vsel %vm184, %v694, 0
      %v708 = vsel %vm184, %v695, 0
      %v711 = vsel %vm197, %v697, 0
      %713 = vmatpush.bf16.msra.mxu0 0
      %714 = vmatpush.bf16.msra.mxu0 0
      %715 = vmatpush.bf16.msra.mxu0 0
      %716 = vmatpush.bf16.msra.mxu0 0
      %717 = vmatpush.bf16.msra.mxu0 0
      %718 = vmatpush.bf16.msra.mxu0 0
      %719 = vmatpush.bf16.msra.mxu0 0
      %720 = vmatpush.bf16.msra.mxu0 %v711
      %721 = vmatmul.bf16.gmra.mxu0 %v699
      %v722 = vpop.f32.mrf.mxu0
      %v723 = vadd.f32 0.0, %v722
      %v724 = vpop.f32.mrf.mxu0
      %v725 = vadd.f32 0.0, %v724
      %726 = vmatmul.bf16.gmra.mxu0 %v702
      %v727 = vpop.f32.mrf.mxu0
      %v728 = vadd.f32 0.0, %v727
      %v729 = vpop.f32.mrf.mxu0
      %v730 = vadd.f32 0.0, %v729
      %731 = vmatmul.bf16.gmra.mxu0 %v705
      %v732 = vpop.f32.mrf.mxu0
      %v733 = vadd.f32 0.0, %v732
      %v734 = vpop.f32.mrf.mxu0
      %v735 = vadd.f32 0.0, %v734
      %736 = vmatmul.bf16.gmra.mxu0 %v708
      %v737 = vpop.f32.mrf.mxu0
      %v738 = vadd.f32 0.0, %v737
      %v739 = vpop.f32.mrf.mxu0
      %v740 = vadd.f32 0.0, %v739
      %741 = vdwg.mxu0
      %v742 = vadd.f32 %v674, %v723
      %v743 = vadd.f32 %v675, %v725
      %v744 = vadd.f32 %v676, %v728
      %v745 = vadd.f32 %v677, %v730
      %v746 = vadd.f32 %v678, %v733
      %v747 = vadd.f32 %v679, %v735
      %v748 = vadd.f32 %v680, %v738
      %v749 = vadd.f32 %v681, %v740
      %v750 = vld [vmem:[%s2] sm:$0x1]
      %v752 = vperm.slane %v750, 0
      %v754 = vadd.f32 %v742, %v752
      %v755 = vadd.f32 %v743, %v752
      %v756 = vadd.f32 %v744, %v752
      %v757 = vadd.f32 %v745, %v752
      %v758 = vadd.f32 %v746, %v752
      %v759 = vadd.f32 %v747, %v752
      %v760 = vadd.f32 %v748, %v752
      %v761 = vadd.f32 %v749, %v752
      %v762 = vmax.f32 %v754, 0.0
      %v763 = vmax.f32 %v755, 0.0
      %v764 = vmax.f32 %v756, 0.0
      %v765 = vmax.f32 %v757, 0.0
      %v766 = vmax.f32 %v758, 0.0
      %v767 = vmax.f32 %v759, 0.0
      %v768 = vmax.f32 %v760, 0.0
      %v769 = vmax.f32 %v761, 0.0
      %v770 = vpack.c.bf16 %v762, %v762
      %v771 = vpack.c.bf16 %v763, %v763
      %v772 = vpack.c.bf16 %v764, %v764
      %v773 = vpack.c.bf16 %v765, %v765
      %v774 = vpack.c.bf16 %v766, %v766
      %v775 = vpack.c.bf16 %v767, %v767
      %v776 = vpack.c.bf16 %v768, %v768
      %v777 = vpack.c.bf16 %v769, %v769
      %778 = vst [vmem:[%s150] sm:$0xf] %v770
      %779 = vst [vmem:[%s150 + $0x4] sm:$0xf] %v771
      %780 = vst [vmem:[%s150 + $0x8] sm:$0xf] %v772
      %781 = vst [vmem:[%s150 + $0xc] sm:$0xf] %v773
      %782 = vst [vmem:[%s150 + $0x10] sm:$0xf] %v774
      %783 = vst [vmem:[%s150 + $0x14] sm:$0xf] %v775
      %784 = vst [vmem:[%s150 + $0x18] sm:$0xf] %v776
      %785 = vst [vmem:[%s150 + $0x1c] sm:$0xf] %v777
      %s786 = smul.u32 8, %s14
      %p787 = scmp.lt.s32.totalorder %s786, 23
      %s788 = scalar_select %p787, %s786, 23
      %s789 = smul.addr %s788, 4
      %s790 = scalar_lea.vmem %s3, %s789
      // Predicated region
      $region33: #{basic_block_forward.2} parent=31 // pred_check
        %p791 = pneg %p95
      $region34: #{basic_block_forward.2} parent=31 // pred_check_branch
        %793 = sbr.rel (%p791) target = $region36
      $region35: #{basic_block_forward.2} parent=31 // pred_region
        %s794 = smul.u32 8, %s14
      $region36: #{basic_block_forward.2} parent=31 // pred_fallthru
        _
    $region32: #{basic_block_forward.2} parent=5 // pred_fallthru
      _
    %p795 = scmp.le.s32.totalorder 2, %s9
    // Predicated region
    $region37: #{basic_block_forward.2} parent=5 // pred_check
      %p796 = pneg %p795
    $region38: #{basic_block_forward.2} parent=5 // pred_check_branch
      %798 = sbr.rel (%p796) target = $region40
    $region39: #{basic_block_forward.2} parent=5 // pred_region
      %s799 = ssub.s32 %s9, 2
      // Predicated region
      $region41: #{basic_block_forward.2} parent=39 // pred_check
        %p800 = pneg %p101
      $region42: #{basic_block_forward.2} parent=39 // pred_check_branch
        %802 = sbr.rel (%p800) target = $region44
      $region43: #{basic_block_forward.2} parent=39 // pred_region
        %s803 = smul.u32 8, %s15
        %p804 = scmp.lt.s32.totalorder %s803, 23
        %s805 = scalar_select %p804, %s803, 23
        %s806 = smul.addr %s805, 4
        %s807 = scalar_lea.vmem %s3, %s806
      $region44: #{basic_block_forward.2} parent=39 // pred_fallthru
        _
    $region40: #{basic_block_forward.2} parent=5 // pred_fallthru
      _
  $region6: #{basic_block_forward.2} parent=0 // loop_footer
    %s13 = sadd.s32 1, %s9
  $region7: #{basic_block_forward.2} parent=0 // loop_footer_branch
    %8 = sbr.rel target = $region3
  $region8: #{basic_block_forward.2} parent=0 // loop_exit
    _

// kernel: basic_block_forward.3
$region0: #{basic_block_forward.3}
  #allocation0 [shape = 'u32[]', space=smem, size = 0x4, offset = 0x4, fixed_abs, tag = 'smem constant byte address 0x4 - core index']
  #allocation1 [shape = 'u32[72,128]{1,0:T(1,128)}', space=vmem, size = 0x9000, scoped, tag = 'internal scratch']
  %s0 = inlined_call_operand.vmem [shape: f32[1,280,128], index: 0, kind: input, shape index: {}]
  %s1 = inlined_call_operand.vmem [shape: bf16[9,128,128], index: 1, kind: input, shape index: {}]
  %s2 = inlined_call_operand.vmem [shape: f32[1,128], index: 2, kind: input, shape index: {}]
  %s3 = inlined_call_operand.vmem [shape: bf16[256,4], index: 3, kind: input, shape index: {}]
  %s4 = inlined_call_operand.vmem [shape: bf16[4,128], index: 4, kind: input, shape index: {}]
  %s5 = inlined_call_operand.vmem [shape: f32[1,128], index: 5, kind: input, shape index: {}]
  %s6 = inlined_call_operand.vmem [shape: f32[256,128], index: 6, kind: output, shape index: {}]
  %s7 = sld [smem:[#allocation0]]
  $region57: #{basic_block_forward.3} parent=0
    _
  %s9 = ssub.s32 1, %s7
  %s10 = scalar_select 0, %s9, %s7
  loop: start=0, step=1, limit=6
  $region2: #{basic_block_forward.3} parent=0 // loop_pre_header
    _
  $region3: #{basic_block_forward.3} parent=0 // loop_header
    %s12 = sphi 0, %s16
    %p13 = scmp.ge.s32.totalorder %s12, 6
    %s20 = sphi 0, %s20
    %s22 = sphi 0, %s20
    %s23 = sphi 0, %s22
    %s37 = sphi 0, %s23
    %s41 = sphi 0, %s41
    %s43 = sphi 0, %s41
    %s44 = sphi 0, %s43
    %s58 = sphi 0, %s44
    %s62 = sphi 0, %s62
    %s64 = sphi 0, %s62
    %s65 = sphi 0, %s64
    %s79 = sphi 0, %s65
    %s85 = sphi 0, %s87
    %s88 = sphi 0, %s85
    %s89 = sphi 0, %s88
    %s105 = sphi 0, %s89
    %s109 = sphi 0, %s109
    %s111 = sphi 0, %s109
    %s112 = sphi 0, %s111
    %s126 = sphi 0, %s112
    %s130 = sphi 0, %s130
    %s132 = sphi 0, %s130
    %s133 = sphi 0, %s132
    %s147 = sphi 0, %s133
    %s153 = sphi 0, %s155
    %s156 = sphi 0, %s153
    %s157 = sphi 0, %s156
    %s173 = sphi 0, %s157
  $region4: #{basic_block_forward.3} parent=0 // loop_header_branch
    %15 = sbr.rel (%p13) target = $region8
  $region5: #{basic_block_forward.3} parent=0 // loop_body
    %s17 = ssub.s32 %s12, 1
    %s18 = ssub.s32 %s12, 2
    %s19 = sadd.s32 %s12, 1
    %s21 = sadd.s32 %s20, 1
    %p24 = scmp.eq.s32.totalorder %s12, 3
    %p25 = scmp.ne.s32.totalorder %s20, %s22
    %p26 = scmp.eq.s32.totalorder %s12, 0
    %p27 = por %p25, %p26
    %p28 = scmp.ne.s32.totalorder %s20, %s22
    %p29 = scmp.eq.s32.totalorder %s17, 3
    %p30 = por %p28, %p29
    %p31 = scmp.ne.s32.totalorder %s22, %s23
    %p32 = scmp.eq.s32.totalorder %s17, 0
    %p33 = por %p31, %p32
    %p34 = scmp.ne.s32.totalorder %s22, %s23
    %p35 = scmp.eq.s32.totalorder %s18, 3
    %p36 = por %p34, %p35
    %p38 = scmp.ne.s32.totalorder %s23, %s37
    %p39 = scmp.eq.s32.totalorder %s18, 0
    %p40 = por %p38, %p39
    %s42 = sadd.s32 %s41, 1
    %p45 = scmp.eq.s32.totalorder %s12, 3
    %p46 = scmp.ne.s32.totalorder %s41, %s43
    %p47 = scmp.eq.s32.totalorder %s12, 0
    %p48 = por %p46, %p47
    %p49 = scmp.ne.s32.totalorder %s41, %s43
    %p50 = scmp.eq.s32.totalorder %s17, 3
    %p51 = por %p49, %p50
    %p52 = scmp.ne.s32.totalorder %s43, %s44
    %p53 = scmp.eq.s32.totalorder %s17, 0
    %p54 = por %p52, %p53
    %p55 = scmp.ne.s32.totalorder %s43, %s44
    %p56 = scmp.eq.s32.totalorder %s18, 3
    %p57 = por %p55, %p56
    %p59 = scmp.ne.s32.totalorder %s44, %s58
    %p60 = scmp.eq.s32.totalorder %s18, 0
    %p61 = por %p59, %p60
    %s63 = sadd.s32 %s62, 1
    %p66 = scmp.eq.s32.totalorder %s12, 3
    %p67 = scmp.ne.s32.totalorder %s62, %s64
    %p68 = scmp.eq.s32.totalorder %s12, 0
    %p69 = por %p67, %p68
    %p70 = scmp.ne.s32.totalorder %s62, %s64
    %p71 = scmp.eq.s32.totalorder %s17, 3
    %p72 = por %p70, %p71
    %p73 = scmp.ne.s32.totalorder %s64, %s65
    %p74 = scmp.eq.s32.totalorder %s17, 0
    %p75 = por %p73, %p74
    %p76 = scmp.ne.s32.totalorder %s64, %s65
    %p77 = scmp.eq.s32.totalorder %s18, 3
    %p78 = por %p76, %p77
    %p80 = scmp.ne.s32.totalorder %s65, %s79
    %p81 = scmp.eq.s32.totalorder %s18, 0
    %p82 = por %p80, %p81
    %s83 = ssub.s32 %s12, %s19
    %p84 = scmp.eq.s32.totalorder %s83, 0
    %s86 = sadd.s32 %s85, 1
    %s87 = scalar_select %p84, %s85, %s86
    %p90 = pneg %p84
    %p91 = scmp.eq.s32.totalorder %s12, 3
    %p92 = por %p90, %p91
    %p93 = scmp.ne.s32.totalorder %s85, %s88
    %p94 = scmp.eq.s32.totalorder %s12, 0
    %p95 = por %p93, %p94
    %p96 = scmp.ne.s32.totalorder %s85, %s88
    %p97 = scmp.eq.s32.totalorder %s17, 3
    %p98 = por %p96, %p97
    %p99 = scmp.ne.s32.totalorder %s88, %s89
    %p100 = scmp.eq.s32.totalorder %s17, 0
    %p101 = por %p99, %p100
    %p102 = scmp.ne.s32.totalorder %s88, %s89
    %p103 = scmp.eq.s32.totalorder %s18, 3
    %p104 = por %p102, %p103
    %p106 = scmp.ne.s32.totalorder %s89, %s105
    %p107 = scmp.eq.s32.totalorder %s18, 0
    %p108 = por %p106, %p107
    %s110 = sadd.s32 %s109, 1
    %p113 = scmp.eq.s32.totalorder %s12, 3
    %p114 = scmp.ne.s32.totalorder %s109, %s111
    %p115 = scmp.eq.s32.totalorder %s12, 0
    %p116 = por %p114, %p115
    %p117 = scmp.ne.s32.totalorder %s109, %s111
    %p118 = scmp.eq.s32.totalorder %s17, 3
    %p119 = por %p117, %p118
    %p120 = scmp.ne.s32.totalorder %s111, %s112
    %p121 = scmp.eq.s32.totalorder %s17, 0
    %p122 = por %p120, %p121
    %p123 = scmp.ne.s32.totalorder %s111, %s112
    %p124 = scmp.eq.s32.totalorder %s18, 3
    %p125 = por %p123, %p124
    %p127 = scmp.ne.s32.totalorder %s112, %s126
    %p128 = scmp.eq.s32.totalorder %s18, 0
    %p129 = por %p127, %p128
    %s131 = sadd.s32 %s130, 1
    %p134 = scmp.eq.s32.totalorder %s12, 3
    %p135 = scmp.ne.s32.totalorder %s130, %s132
    %p136 = scmp.eq.s32.totalorder %s12, 0
    %p137 = por %p135, %p136
    %p138 = scmp.ne.s32.totalorder %s130, %s132
    %p139 = scmp.eq.s32.totalorder %s17, 3
    %p140 = por %p138, %p139
    %p141 = scmp.ne.s32.totalorder %s132, %s133
    %p142 = scmp.eq.s32.totalorder %s17, 0
    %p143 = por %p141, %p142
    %p144 = scmp.ne.s32.totalorder %s132, %s133
    %p145 = scmp.eq.s32.totalorder %s18, 3
    %p146 = por %p144, %p145
    %p148 = scmp.ne.s32.totalorder %s133, %s147
    %p149 = scmp.eq.s32.totalorder %s18, 0
    %p150 = por %p148, %p149
    %s151 = ssub.s32 %s12, %s19
    %p152 = scmp.eq.s32.totalorder %s151, 0
    %s154 = sadd.s32 %s153, 1
    %s155 = scalar_select %p152, %s153, %s154
    %p158 = pneg %p152
    %p159 = scmp.eq.s32.totalorder %s12, 3
    %p160 = por %p158, %p159
    %p161 = scmp.ne.s32.totalorder %s153, %s156
    %p162 = scmp.eq.s32.totalorder %s12, 0
    %p163 = por %p161, %p162
    %p164 = scmp.ne.s32.totalorder %s153, %s156
    %p165 = scmp.eq.s32.totalorder %s17, 3
    %p166 = por %p164, %p165
    %p167 = scmp.ne.s32.totalorder %s156, %s157
    %p168 = scmp.eq.s32.totalorder %s17, 0
    %p169 = por %p167, %p168
    %p170 = scmp.ne.s32.totalorder %s156, %s157
    %p171 = scmp.eq.s32.totalorder %s18, 3
    %p172 = por %p170, %p171
    %p174 = scmp.ne.s32.totalorder %s157, %s173
    %p175 = scmp.eq.s32.totalorder %s18, 0
    %p176 = por %p174, %p175
    %p177 = scmp.le.s32.totalorder 1, %s12
    %p178 = scmp.lt.s32.totalorder %s12, 5
    %p179 = pnand %p177, %p178
    %p180 = pneg %p179
    // Predicated region
    $region9: #{basic_block_forward.3} parent=5 // pred_check
      _
    $region10: #{basic_block_forward.3} parent=5 // pred_check_branch
      %182 = sbr.rel (%p179) target = $region12
    $region11: #{basic_block_forward.3} parent=5 // pred_region
      %s183 = ssub.s32 %s12, 1
      // Predicated region
      $region13: #{basic_block_forward.3} parent=11 // pred_check
        %p184 = pneg %p33
      $region14: #{basic_block_forward.3} parent=11 // pred_check_branch
        %186 = sbr.rel (%p184) target = $region16
      $region15: #{basic_block_forward.3} parent=11 // pred_region
        _
      $region16: #{basic_block_forward.3} parent=11 // pred_fallthru
        _
      // Predicated region
      $region17: #{basic_block_forward.3} parent=11 // pred_check
        %p187 = pneg %p54
      $region18: #{basic_block_forward.3} parent=11 // pred_check_branch
        %189 = sbr.rel (%p187) target = $region20
      $region19: #{basic_block_forward.3} parent=11 // pred_region
        _
      $region20: #{basic_block_forward.3} parent=11 // pred_fallthru
        _
      // Predicated region
      $region21: #{basic_block_forward.3} parent=11 // pred_check
        %p190 = pneg %p75
      $region22: #{basic_block_forward.3} parent=11 // pred_check_branch
        %192 = sbr.rel (%p190) target = $region24
      $region23: #{basic_block_forward.3} parent=11 // pred_region
        _
      $region24: #{basic_block_forward.3} parent=11 // pred_fallthru
        _
      // Predicated region
      $region25: #{basic_block_forward.3} parent=11 // pred_check
        %p193 = pneg %p122
      $region26: #{basic_block_forward.3} parent=11 // pred_check_branch
        %195 = sbr.rel (%p193) target = $region28
      $region27: #{basic_block_forward.3} parent=11 // pred_region
        _
      $region28: #{basic_block_forward.3} parent=11 // pred_fallthru
        _
      // Predicated region
      $region29: #{basic_block_forward.3} parent=11 // pred_check
        %p196 = pneg %p143
      $region30: #{basic_block_forward.3} parent=11 // pred_check_branch
        %198 = sbr.rel (%p196) target = $region32
      $region31: #{basic_block_forward.3} parent=11 // pred_region
        _
      $region32: #{basic_block_forward.3} parent=11 // pred_fallthru
        _
    $region12: #{basic_block_forward.3} parent=5 // pred_fallthru
      _
    %p199 = scmp.lt.s32.totalorder %s12, 4
    // Predicated region
    $region33: #{basic_block_forward.3} parent=5 // pred_check
      %p200 = pneg %p199
    $region34: #{basic_block_forward.3} parent=5 // pred_check_branch
      %202 = sbr.rel (%p200) target = $region36
    $region35: #{basic_block_forward.3} parent=5 // pred_region
      // Predicated region
      $region37: #{basic_block_forward.3} parent=35 // pred_check
        %p203 = pneg %p95
      $region38: #{basic_block_forward.3} parent=35 // pred_check_branch
        %205 = sbr.rel (%p203) target = $region40
      $region39: #{basic_block_forward.3} parent=35 // pred_region
        %s206 = smul.u32 8, %s12
        %p207 = scmp.lt.s32.totalorder %s206, 31
        %s208 = scalar_select %p207, %s206, 31
        %s209 = smul.addr %s208, 4
        %s210 = scalar_lea.vmem %s3, %s209
        %s211 = smul.u32 8, %s12
      $region40: #{basic_block_forward.3} parent=35 // pred_fallthru
        _
    $region36: #{basic_block_forward.3} parent=5 // pred_fallthru
      _
    %p212 = scmp.le.s32.totalorder 1, %s12
    %p213 = scmp.lt.s32.totalorder %s12, 5
    %p214 = pnand %p212, %p213
    %p215 = pneg %p214
    // Predicated region
    $region41: #{basic_block_forward.3} parent=5 // pred_check
      _
    $region42: #{basic_block_forward.3} parent=5 // pred_check_branch
      %217 = sbr.rel (%p214) target = $region44
    $region43: #{basic_block_forward.3} parent=5 // pred_region
      %s218 = ssub.s32 %s12, 1
      %p219 = pneg %p33
      %p220 = pneg %p30
      %p221 = pneg %p54
      %p222 = pneg %p51
      %p223 = pneg %p75
      %p224 = pneg %p72
      %s225 = smul.u32 8, %s17
      %p226 = scmp.lt.s32.totalorder %s225, 31
      %s227 = scalar_select %p226, %s225, 31
      %s228 = smul.addr %s227, 4
      %s229 = scalar_lea.vmem %s3, %s228
      %p230 = pneg %p101
      %p231 = pneg %p98
      %p232 = pneg %p122
      %p233 = pneg %p119
      %p234 = pneg %p143
      %p235 = pneg %p140
      %p236 = pneg %p169
      %p237 = pneg %p166
      %s238 = smul.u32 8, %s17
      %p239 = scmp.lt.s32.totalorder %s238, 31
      %s240 = scalar_select %p239, %s238, 31
      %s241 = smul.addr %s240, 8
      %s242 = scalar_lea.vmem %s6, %s241
      %s243 = smul.u32 8, %s17
      %p244 = scmp.lt.s32.totalorder %s243, 31
      %s245 = scalar_select %p244, %s243, 31
      %s246 = smul.addr %s245, 4
      %s247 = scalar_lea.vmem %s3, %s246
      %s248 = smul.u32 8, %s17
      %s249 = smul.u32 8, %s17
      %p250 = scmp.lt.s32.totalorder %s249, 31
      %s251 = scalar_select %p250, %s249, 31
      %s252 = smul.addr %s251, 8
      %s253 = scalar_lea.vmem %s6, %s252
      %s254 = smul.u32 8, %s17
      %s256 = smul.u32 %s17, 64
      %s257 = sadd.s32 %s256, 11
      %s258 = scalar_lea.vmem %s0, %s256
      %v259 = vld [vmem:[%s258] sm:$0xff]
      %v260 = vld [vmem:[%s258 + $0x8] sm:$0xff]
      %v261 = vld [vmem:[%s258 + $0x10] sm:$0xff]
      %v262 = vld [vmem:[%s258 + $0x18] sm:$0xff]
      %v263 = vld [vmem:[%s258 + $0x20] sm:$0xff]
      %v264 = vld [vmem:[%s258 + $0x28] sm:$0xff]
      %v265 = vld [vmem:[%s258 + $0x30] sm:$0xff]
      %v266 = vld [vmem:[%s258 + $0x38] sm:$0xff]
      %v267 = vpack.c.bf16 %v260, %v259
      %v268 = vpack.c.bf16 %v262, %v261
      %v269 = vpack.c.bf16 %v264, %v263
      %v270 = vpack.c.bf16 %v266, %v265
      %v271 = vld [vmem:[%s1] sm:$0xf]
      %v272 = vld [vmem:[%s1 + $0x4] sm:$0xf]
      %v273 = vld [vmem:[%s1 + $0x8] sm:$0xf]
      %v274 = vld [vmem:[%s1 + $0xc] sm:$0xf]
      %v275 = vld [vmem:[%s1 + $0x10] sm:$0xf]
      %v276 = vld [vmem:[%s1 + $0x14] sm:$0xf]
      %v277 = vld [vmem:[%s1 + $0x18] sm:$0xf]
      %v278 = vld [vmem:[%s1 + $0x1c] sm:$0xf]
      %v279 = vld [vmem:[%s1 + $0x20] sm:$0xf]
      %v280 = vld [vmem:[%s1 + $0x24] sm:$0xf]
      %v281 = vld [vmem:[%s1 + $0x28] sm:$0xf]
      %v282 = vld [vmem:[%s1 + $0x2c] sm:$0xf]
      %v283 = vld [vmem:[%s1 + $0x30] sm:$0xf]
      %v284 = vld [vmem:[%s1 + $0x34] sm:$0xf]
      %v285 = vld [vmem:[%s1 + $0x38] sm:$0xf]
      %v286 = vld [vmem:[%s1 + $0x3c] sm:$0xf]
      %s287 = sadd.s32 %s256, 1
      %s288 = scalar_lea.vmem %s0, %s287
      %v289 = vld [vmem:[%s288] sm:$0xff]
      %v290 = vld [vmem:[%s288 + $0x8] sm:$0xff]
      %v291 = vld [vmem:[%s288 + $0x10] sm:$0xff]
      %v292 = vld [vmem:[%s288 + $0x18] sm:$0xff]
      %v293 = vld [vmem:[%s288 + $0x20] sm:$0xff]
      %v294 = vld [vmem:[%s288 + $0x28] sm:$0xff]
      %v295 = vld [vmem:[%s288 + $0x30] sm:$0xff]
      %v296 = vld [vmem:[%s288 + $0x38] sm:$0xff]
      %v297 = vpack.c.bf16 %v290, %v289
      %v298 = vpack.c.bf16 %v292, %v291
      %v299 = vpack.c.bf16 %v294, %v293
      %v300 = vpack.c.bf16 %v296, %v295
      %s301 = scalar_lea.vmem %s1, 64
      %v302 = vld [vmem:[%s301] sm:$0xf]
      %v303 = vld [vmem:[%s301 + $0x4] sm:$0xf]
      %v304 = vld [vmem:[%s301 + $0x8] sm:$0xf]
      %v305 = vld [vmem:[%s301 + $0xc] sm:$0xf]
      %v306 = vld [vmem:[%s301 + $0x10] sm:$0xf]
      %v307 = vld [vmem:[%s301 + $0x14] sm:$0xf]
      %v308 = vld [vmem:[%s301 + $0x18] sm:$0xf]
      %v309 = vld [vmem:[%s301 + $0x1c] sm:$0xf]
      %v310 = vld [vmem:[%s301 + $0x20] sm:$0xf]
      %v311 = vld [vmem:[%s301 + $0x24] sm:$0xf]
      %v312 = vld [vmem:[%s301 + $0x28] sm:$0xf]
      %v313 = vld [vmem:[%s301 + $0x2c] sm:$0xf]
      %v314 = vld [vmem:[%s301 + $0x30] sm:$0xf]
      %v315 = vld [vmem:[%s301 + $0x34] sm:$0xf]
      %v316 = vld [vmem:[%s301 + $0x38] sm:$0xf]
      %v317 = vld [vmem:[%s301 + $0x3c] sm:$0xf]
      %v334 = vunpack.c.l.b16 %v302
      %v335 = vunpack.c.l.b16 %v303
      %v336 = vunpack.c.l.b16 %v304
      %v337 = vunpack.c.l.b16 %v305
      %v338 = vunpack.c.l.b16 %v306
      %v339 = vunpack.c.l.b16 %v307
      %v340 = vunpack.c.l.b16 %v308
      %v341 = vunpack.c.l.b16 %v309
      %v342 = vunpack.c.l.b16 %v310
      %v343 = vunpack.c.l.b16 %v311
      %v344 = vunpack.c.l.b16 %v312
      %v345 = vunpack.c.l.b16 %v313
      %v346 = vunpack.c.l.b16 %v314
      %v347 = vunpack.c.l.b16 %v315
      %v348 = vunpack.c.l.b16 %v316
      %v349 = vunpack.c.l.b16 %v317
      %v350 = vpack.c.b16 %v335, %v334
      %v351 = vpack.c.b16 %v337, %v336
      %v352 = vpack.c.b16 %v339, %v338
      %v353 = vpack.c.b16 %v341, %v340
      %v354 = vpack.c.b16 %v343, %v342
      %v355 = vpack.c.b16 %v345, %v344
      %v356 = vpack.c.b16 %v347, %v346
      %v357 = vpack.c.b16 %v349, %v348
      %366 = vmatpush.bf16.msra.mxu0 %v357
      %367 = vmatpush.bf16.msra.mxu0 %v356
      %368 = vmatpush.bf16.msra.mxu0 %v355
      %369 = vmatpush.bf16.msra.mxu0 %v354
      %370 = vmatpush.bf16.msra.mxu0 %v353
      %371 = vmatpush.bf16.msra.mxu0 %v352
      %372 = vmatpush.bf16.msra.mxu0 %v351
      %373 = vmatpush.bf16.msra.mxu0 %v350
      %374 = vmatmul.bf16.gmra.mxu0 %v297
      %v375 = vpop.f32.mrf.mxu0
      %v376 = vadd.f32 0.0, %v375
      %v377 = vpop.f32.mrf.mxu0
      %v378 = vadd.f32 0.0, %v377
      %379 = vmatmul.bf16.gmra.mxu0 %v298
      %v380 = vpop.f32.mrf.mxu0
      %v381 = vadd.f32 0.0, %v380
      %v382 = vpop.f32.mrf.mxu0
      %v383 = vadd.f32 0.0, %v382
      %384 = vmatmul.bf16.gmra.mxu0 %v299
      %v385 = vpop.f32.mrf.mxu0
      %v386 = vadd.f32 0.0, %v385
      %v387 = vpop.f32.mrf.mxu0
      %v388 = vadd.f32 0.0, %v387
      %389 = vmatmul.bf16.gmra.mxu0 %v300
      %v390 = vpop.f32.mrf.mxu0
      %v391 = vadd.f32 0.0, %v390
      %v392 = vpop.f32.mrf.mxu0
      %v393 = vadd.f32 0.0, %v392
      %394 = vdwg.mxu0
      %v411 = vunpack.c.l.b16 %v271
      %v412 = vunpack.c.l.b16 %v272
      %v413 = vunpack.c.l.b16 %v273
      %v414 = vunpack.c.l.b16 %v274
      %v415 = vunpack.c.l.b16 %v275
      %v416 = vunpack.c.l.b16 %v276
      %v417 = vunpack.c.l.b16 %v277
      %v418 = vunpack.c.l.b16 %v278
      %v419 = vunpack.c.l.b16 %v279
      %v420 = vunpack.c.l.b16 %v280
      %v421 = vunpack.c.l.b16 %v281
      %v422 = vunpack.c.l.b16 %v282
      %v423 = vunpack.c.l.b16 %v283
      %v424 = vunpack.c.l.b16 %v284
      %v425 = vunpack.c.l.b16 %v285
      %v426 = vunpack.c.l.b16 %v286
      %v427 = vpack.c.b16 %v412, %v411
      %v428 = vpack.c.b16 %v414, %v413
      %v429 = vpack.c.b16 %v416, %v415
      %v430 = vpack.c.b16 %v418, %v417
      %v431 = vpack.c.b16 %v420, %v419
      %v432 = vpack.c.b16 %v422, %v421
      %v433 = vpack.c.b16 %v424, %v423
      %v434 = vpack.c.b16 %v426, %v425
      %443 = vmatpush.bf16.msra.mxu0 %v434
      %444 = vmatpush.bf16.msra.mxu0 %v433
      %445 = vmatpush.bf16.msra.mxu0 %v432
      %446 = vmatpush.bf16.msra.mxu0 %v431
      %447 = vmatpush.bf16.msra.mxu0 %v430
      %448 = vmatpush.bf16.msra.mxu0 %v429
      %449 = vmatpush.bf16.msra.mxu0 %v428
      %450 = vmatpush.bf16.msra.mxu0 %v427
      %451 = vmatmul.bf16.gmra.mxu0 %v267
      %v452 = vpop.f32.mrf.mxu0
      %v453 = vadd.f32 %v376, %v452
      %v454 = vpop.f32.mrf.mxu0
      %v455 = vadd.f32 %v378, %v454
      %456 = vmatmul.bf16.gmra.mxu0 %v268
      %v457 = vpop.f32.mrf.mxu0
      %v458 = vadd.f32 %v381, %v457
      %v459 = vpop.f32.mrf.mxu0
      %v460 = vadd.f32 %v383, %v459
      %461 = vmatmul.bf16.gmra.mxu0 %v269
      %v462 = vpop.f32.mrf.mxu0
      %v463 = vadd.f32 %v386, %v462
      %v464 = vpop.f32.mrf.mxu0
      %v465 = vadd.f32 %v388, %v464
      %466 = vmatmul.bf16.gmra.mxu0 %v270
      %v467 = vpop.f32.mrf.mxu0
      %v468 = vadd.f32 %v391, %v467
      %v469 = vpop.f32.mrf.mxu0
      %v470 = vadd.f32 %v393, %v469
      %471 = vdwg.mxu0
      %s472 = sadd.s32 %s256, 2
      %s473 = scalar_lea.vmem %s0, %s472
      %v474 = vld [vmem:[%s473] sm:$0xff]
      %v475 = vld [vmem:[%s473 + $0x8] sm:$0xff]
      %v476 = vld [vmem:[%s473 + $0x10] sm:$0xff]
      %v477 = vld [vmem:[%s473 + $0x18] sm:$0xff]
      %v478 = vld [vmem:[%s473 + $0x20] sm:$0xff]
      %v479 = vld [vmem:[%s473 + $0x28] sm:$0xff]
      %v480 = vld [vmem:[%s473 + $0x30] sm:$0xff]
      %v481 = vld [vmem:[%s473 + $0x38] sm:$0xff]
      %v482 = vpack.c.bf16 %v475, %v474
      %v483 = vpack.c.bf16 %v477, %v476
      %v484 = vpack.c.bf16 %v479, %v478
      %v485 = vpack.c.bf16 %v481, %v480
      %s486 = scalar_lea.vmem %s1, 128
      %v487 = vld [vmem:[%s486] sm:$0xf]
      %v488 = vld [vmem:[%s486 + $0x4] sm:$0xf]
      %v489 = vld [vmem:[%s486 + $0x8] sm:$0xf]
      %v490 = vld [vmem:[%s486 + $0xc] sm:$0xf]
      %v491 = vld [vmem:[%s486 + $0x10] sm:$0xf]
      %v492 = vld [vmem:[%s486 + $0x14] sm:$0xf]
      %v493 = vld [vmem:[%s486 + $0x18] sm:$0xf]
      %v494 = vld [vmem:[%s486 + $0x1c] sm:$0xf]
      %v495 = vld [vmem:[%s486 + $0x20] sm:$0xf]
      %v496 = vld [vmem:[%s486 + $0x24] sm:$0xf]
      %v497 = vld [vmem:[%s486 + $0x28] sm:$0xf]
      %v498 = vld [vmem:[%s486 + $0x2c] sm:$0xf]
      %v499 = vld [vmem:[%s486 + $0x30] sm:$0xf]
      %v500 = vld [vmem:[%s486 + $0x34] sm:$0xf]
      %v501 = vld [vmem:[%s486 + $0x38] sm:$0xf]
      %v502 = vld [vmem:[%s486 + $0x3c] sm:$0xf]
      %v519 = vunpack.c.l.b16 %v487
      %v520 = vunpack.c.l.b16 %v488
      %v521 = vunpack.c.l.b16 %v489
      %v522 = vunpack.c.l.b16 %v490
      %v523 = vunpack.c.l.b16 %v491
      %v524 = vunpack.c.l.b16 %v492
      %v525 = vunpack.c.l.b16 %v493
      %v526 = vunpack.c.l.b16 %v494
      %v527 = vunpack.c.l.b16 %v495
      %v528 = vunpack.c.l.b16 %v496
      %v529 = vunpack.c.l.b16 %v497
      %v530 = vunpack.c.l.b16 %v498
      %v531 = vunpack.c.l.b16 %v499
      %v532 = vunpack.c.l.b16 %v500
      %v533 = vunpack.c.l.b16 %v501
      %v534 = vunpack.c.l.b16 %v502
      %v535 = vpack.c.b16 %v520, %v519
      %v536 = vpack.c.b16 %v522, %v521
      %v537 = vpack.c.b16 %v524, %v523
      %v538 = vpack.c.b16 %v526, %v525
      %v539 = vpack.c.b16 %v528, %v527
      %v540 = vpack.c.b16 %v530, %v529
      %v541 = vpack.c.b16 %v532, %v531
      %v542 = vpack.c.b16 %v534, %v533
      %551 = vmatpush.bf16.msra.mxu0 %v542
      %552 = vmatpush.bf16.msra.mxu0 %v541
      %553 = vmatpush.bf16.msra.mxu0 %v540
      %554 = vmatpush.bf16.msra.mxu0 %v539
      %555 = vmatpush.bf16.msra.mxu0 %v538
      %556 = vmatpush.bf16.msra.mxu0 %v537
      %557 = vmatpush.bf16.msra.mxu0 %v536
      %558 = vmatpush.bf16.msra.mxu0 %v535
      %559 = vmatmul.bf16.gmra.mxu0 %v482
      %v560 = vpop.f32.mrf.mxu0
      %v561 = vadd.f32 0.0, %v560
      %v562 = vpop.f32.mrf.mxu0
      %v563 = vadd.f32 0.0, %v562
      %564 = vmatmul.bf16.gmra.mxu0 %v483
      %v565 = vpop.f32.mrf.mxu0
      %v566 = vadd.f32 0.0, %v565
      %v567 = vpop.f32.mrf.mxu0
      %v568 = vadd.f32 0.0, %v567
      %569 = vmatmul.bf16.gmra.mxu0 %v484
      %v570 = vpop.f32.mrf.mxu0
      %v571 = vadd.f32 0.0, %v570
      %v572 = vpop.f32.mrf.mxu0
      %v573 = vadd.f32 0.0, %v572
      %574 = vmatmul.bf16.gmra.mxu0 %v485
      %v575 = vpop.f32.mrf.mxu0
      %v576 = vadd.f32 0.0, %v575
      %v577 = vpop.f32.mrf.mxu0
      %v578 = vadd.f32 0.0, %v577
      %579 = vdwg.mxu0
      %v580 = vadd.f32 %v453, %v561
      %v581 = vadd.f32 %v455, %v563
      %v582 = vadd.f32 %v458, %v566
      %v583 = vadd.f32 %v460, %v568
      %v584 = vadd.f32 %v463, %v571
      %v585 = vadd.f32 %v465, %v573
      %v586 = vadd.f32 %v468, %v576
      %v587 = vadd.f32 %v470, %v578
      %s588 = sadd.s32 %s256, 10
      %s589 = scalar_lea.vmem %s0, %s588
      %v590 = vld [vmem:[%s589] sm:$0xff]
      %v591 = vld [vmem:[%s589 + $0x8] sm:$0xff]
      %v592 = vld [vmem:[%s589 + $0x10] sm:$0xff]
      %v593 = vld [vmem:[%s589 + $0x18] sm:$0xff]
      %v594 = vld [vmem:[%s589 + $0x20] sm:$0xff]
      %v595 = vld [vmem:[%s589 + $0x28] sm:$0xff]
      %v596 = vld [vmem:[%s589 + $0x30] sm:$0xff]
      %v597 = vld [vmem:[%s589 + $0x38] sm:$0xff]
      %v598 = vpack.c.bf16 %v591, %v590
      %v599 = vpack.c.bf16 %v593, %v592
      %v600 = vpack.c.bf16 %v595, %v594
      %v601 = vpack.c.bf16 %v597, %v596
      %s602 = scalar_lea.vmem %s1, 192
      %v603 = vld [vmem:[%s602] sm:$0xf]
      %v604 = vld [vmem:[%s602 + $0x4] sm:$0xf]
      %v605 = vld [vmem:[%s602 + $0x8] sm:$0xf]
      %v606 = vld [vmem:[%s602 + $0xc] sm:$0xf]
      %v607 = vld [vmem:[%s602 + $0x10] sm:$0xf]
      %v608 = vld [vmem:[%s602 + $0x14] sm:$0xf]
      %v609 = vld [vmem:[%s602 + $0x18] sm:$0xf]
      %v610 = vld [vmem:[%s602 + $0x1c] sm:$0xf]
      %v611 = vld [vmem:[%s602 + $0x20] sm:$0xf]
      %v612 = vld [vmem:[%s602 + $0x24] sm:$0xf]
      %v613 = vld [vmem:[%s602 + $0x28] sm:$0xf]
      %v614 = vld [vmem:[%s602 + $0x2c] sm:$0xf]
      %v615 = vld [vmem:[%s602 + $0x30] sm:$0xf]
      %v616 = vld [vmem:[%s602 + $0x34] sm:$0xf]
      %v617 = vld [vmem:[%s602 + $0x38] sm:$0xf]
      %v618 = vld [vmem:[%s602 + $0x3c] sm:$0xf]
      %v635 = vunpack.c.l.b16 %v603
      %v636 = vunpack.c.l.b16 %v604
      %v637 = vunpack.c.l.b16 %v605
      %v638 = vunpack.c.l.b16 %v606
      %v639 = vunpack.c.l.b16 %v607
      %v640 = vunpack.c.l.b16 %v608
      %v641 = vunpack.c.l.b16 %v609
      %v642 = vunpack.c.l.b16 %v610
      %v643 = vunpack.c.l.b16 %v611
      %v644 = vunpack.c.l.b16 %v612
      %v645 = vunpack.c.l.b16 %v613
      %v646 = vunpack.c.l.b16 %v614
      %v647 = vunpack.c.l.b16 %v615
      %v648 = vunpack.c.l.b16 %v616
      %v649 = vunpack.c.l.b16 %v617
      %v650 = vunpack.c.l.b16 %v618
      %v651 = vpack.c.b16 %v636, %v635
      %v652 = vpack.c.b16 %v638, %v637
      %v653 = vpack.c.b16 %v640, %v639
      %v654 = vpack.c.b16 %v642, %v641
      %v655 = vpack.c.b16 %v644, %v643
      %v656 = vpack.c.b16 %v646, %v645
      %v657 = vpack.c.b16 %v648, %v647
      %v658 = vpack.c.b16 %v650, %v649
      %667 = vmatpush.bf16.msra.mxu0 %v658
      %668 = vmatpush.bf16.msra.mxu0 %v657
      %669 = vmatpush.bf16.msra.mxu0 %v656
      %670 = vmatpush.bf16.msra.mxu0 %v655
      %671 = vmatpush.bf16.msra.mxu0 %v654
      %672 = vmatpush.bf16.msra.mxu0 %v653
      %673 = vmatpush.bf16.msra.mxu0 %v652
      %674 = vmatpush.bf16.msra.mxu0 %v651
      %675 = vmatmul.bf16.gmra.mxu0 %v598
      %v676 = vpop.f32.mrf.mxu0
      %v677 = vadd.f32 0.0, %v676
      %v678 = vpop.f32.mrf.mxu0
      %v679 = vadd.f32 0.0, %v678
      %680 = vmatmul.bf16.gmra.mxu0 %v599
      %v681 = vpop.f32.mrf.mxu0
      %v682 = vadd.f32 0.0, %v681
      %v683 = vpop.f32.mrf.mxu0
      %v684 = vadd.f32 0.0, %v683
      %685 = vmatmul.bf16.gmra.mxu0 %v600
      %v686 = vpop.f32.mrf.mxu0
      %v687 = vadd.f32 0.0, %v686
      %v688 = vpop.f32.mrf.mxu0
      %v689 = vadd.f32 0.0, %v688
      %690 = vmatmul.bf16.gmra.mxu0 %v601
      %v691 = vpop.f32.mrf.mxu0
      %v692 = vadd.f32 0.0, %v691
      %v693 = vpop.f32.mrf.mxu0
      %v694 = vadd.f32 0.0, %v693
      %695 = vdwg.mxu0
      %v696 = vadd.f32 %v580, %v677
      %v697 = vadd.f32 %v581, %v679
      %v698 = vadd.f32 %v582, %v682
      %v699 = vadd.f32 %v583, %v684
      %v700 = vadd.f32 %v584, %v687
      %v701 = vadd.f32 %v585, %v689
      %v702 = vadd.f32 %v586, %v692
      %v703 = vadd.f32 %v587, %v694
      %s704 = scalar_lea.vmem %s0, %s257
      %v705 = vld [vmem:[%s704] sm:$0xff]
      %v706 = vld [vmem:[%s704 + $0x8] sm:$0xff]
      %v707 = vld [vmem:[%s704 + $0x10] sm:$0xff]
      %v708 = vld [vmem:[%s704 + $0x18] sm:$0xff]
      %v709 = vld [vmem:[%s704 + $0x20] sm:$0xff]
      %v710 = vld [vmem:[%s704 + $0x28] sm:$0xff]
      %v711 = vld [vmem:[%s704 + $0x30] sm:$0xff]
      %v712 = vld [vmem:[%s704 + $0x38] sm:$0xff]
      %v713 = vpack.c.bf16 %v706, %v705
      %v714 = vpack.c.bf16 %v708, %v707
      %v715 = vpack.c.bf16 %v710, %v709
      %v716 = vpack.c.bf16 %v712, %v711
      %s717 = scalar_lea.vmem %s1, 256
      %v718 = vld [vmem:[%s717] sm:$0xf]
      %v719 = vld [vmem:[%s717 + $0x4] sm:$0xf]
      %v720 = vld [vmem:[%s717 + $0x8] sm:$0xf]
      %v721 = vld [vmem:[%s717 + $0xc] sm:$0xf]
      %v722 = vld [vmem:[%s717 + $0x10] sm:$0xf]
      %v723 = vld [vmem:[%s717 + $0x14] sm:$0xf]
      %v724 = vld [vmem:[%s717 + $0x18] sm:$0xf]
      %v725 = vld [vmem:[%s717 + $0x1c] sm:$0xf]
      %v726 = vld [vmem:[%s717 + $0x20] sm:$0xf]
      %v727 = vld [vmem:[%s717 + $0x24] sm:$0xf]
      %v728 = vld [vmem:[%s717 + $0x28] sm:$0xf]
      %v729 = vld [vmem:[%s717 + $0x2c] sm:$0xf]
      %v730 = vld [vmem:[%s717 + $0x30] sm:$0xf]
      %v731 = vld [vmem:[%s717 + $0x34] sm:$0xf]
      %v732 = vld [vmem:[%s717 + $0x38] sm:$0xf]
      %v733 = vld [vmem:[%s717 + $0x3c] sm:$0xf]
      %v750 = vunpack.c.l.b16 %v718
      %v751 = vunpack.c.l.b16 %v719
      %v752 = vunpack.c.l.b16 %v720
      %v753 = vunpack.c.l.b16 %v721
      %v754 = vunpack.c.l.b16 %v722
      %v755 = vunpack.c.l.b16 %v723
      %v756 = vunpack.c.l.b16 %v724
      %v757 = vunpack.c.l.b16 %v725
      %v758 = vunpack.c.l.b16 %v726
      %v759 = vunpack.c.l.b16 %v727
      %v760 = vunpack.c.l.b16 %v728
      %v761 = vunpack.c.l.b16 %v729
      %v762 = vunpack.c.l.b16 %v730
      %v763 = vunpack.c.l.b16 %v731
      %v764 = vunpack.c.l.b16 %v732
      %v765 = vunpack.c.l.b16 %v733
      %v766 = vpack.c.b16 %v751, %v750
      %v767 = vpack.c.b16 %v753, %v752
      %v768 = vpack.c.b16 %v755, %v754
      %v769 = vpack.c.b16 %v757, %v756
      %v770 = vpack.c.b16 %v759, %v758
      %v771 = vpack.c.b16 %v761, %v760
      %v772 = vpack.c.b16 %v763, %v762
      %v773 = vpack.c.b16 %v765, %v764
      %782 = vmatpush.bf16.msra.mxu0 %v773
      %783 = vmatpush.bf16.msra.mxu0 %v772
      %784 = vmatpush.bf16.msra.mxu0 %v771
      %785 = vmatpush.bf16.msra.mxu0 %v770
      %786 = vmatpush.bf16.msra.mxu0 %v769
      %787 = vmatpush.bf16.msra.mxu0 %v768
      %788 = vmatpush.bf16.msra.mxu0 %v767
      %789 = vmatpush.bf16.msra.mxu0 %v766
      %790 = vmatmul.bf16.gmra.mxu0 %v713
      %v791 = vpop.f32.mrf.mxu0
      %v792 = vadd.f32 0.0, %v791
      %v793 = vpop.f32.mrf.mxu0
      %v794 = vadd.f32 0.0, %v793
      %795 = vmatmul.bf16.gmra.mxu0 %v714
      %v796 = vpop.f32.mrf.mxu0
      %v797 = vadd.f32 0.0, %v796
      %v798 = vpop.f32.mrf.mxu0
      %v799 = vadd.f32 0.0, %v798
      %800 = vmatmul.bf16.gmra.mxu0 %v715
      %v801 = vpop.f32.mrf.mxu0
      %v802 = vadd.f32 0.0, %v801
      %v803 = vpop.f32.mrf.mxu0
      %v804 = vadd.f32 0.0, %v803
      %805 = vmatmul.bf16.gmra.mxu0 %v716
      %v806 = vpop.f32.mrf.mxu0
      %v807 = vadd.f32 0.0, %v806
      %v808 = vpop.f32.mrf.mxu0
      %v809 = vadd.f32 0.0, %v808
      %810 = vdwg.mxu0
      %v811 = vadd.f32 %v696, %v792
      %v812 = vadd.f32 %v697, %v794
      %v813 = vadd.f32 %v698, %v797
      %v814 = vadd.f32 %v699, %v799
      %v815 = vadd.f32 %v700, %v802
      %v816 = vadd.f32 %v701, %v804
      %v817 = vadd.f32 %v702, %v807
      %v818 = vadd.f32 %v703, %v809
      %s819 = sadd.s32 %s256, 12
      %s820 = scalar_lea.vmem %s0, %s819
      %v821 = vld [vmem:[%s820] sm:$0xff]
      %v822 = vld [vmem:[%s820 + $0x8] sm:$0xff]
      %v823 = vld [vmem:[%s820 + $0x10] sm:$0xff]
      %v824 = vld [vmem:[%s820 + $0x18] sm:$0xff]
      %v825 = vld [vmem:[%s820 + $0x20] sm:$0xff]
      %v826 = vld [vmem:[%s820 + $0x28] sm:$0xff]
      %v827 = vld [vmem:[%s820 + $0x30] sm:$0xff]
      %v828 = vld [vmem:[%s820 + $0x38] sm:$0xff]
      %v829 = vpack.c.bf16 %v822, %v821
      %v830 = vpack.c.bf16 %v824, %v823
      %v831 = vpack.c.bf16 %v826, %v825
      %v832 = vpack.c.bf16 %v828, %v827
      %s833 = scalar_lea.vmem %s1, 320
      %v834 = vld [vmem:[%s833] sm:$0xf]
      %v835 = vld [vmem:[%s833 + $0x4] sm:$0xf]
      %v836 = vld [vmem:[%s833 + $0x8] sm:$0xf]
      %v837 = vld [vmem:[%s833 + $0xc] sm:$0xf]
      %v838 = vld [vmem:[%s833 + $0x10] sm:$0xf]
      %v839 = vld [vmem:[%s833 + $0x14] sm:$0xf]
      %v840 = vld [vmem:[%s833 + $0x18] sm:$0xf]
      %v841 = vld [vmem:[%s833 + $0x1c] sm:$0xf]
      %v842 = vld [vmem:[%s833 + $0x20] sm:$0xf]
      %v843 = vld [vmem:[%s833 + $0x24] sm:$0xf]
      %v844 = vld [vmem:[%s833 + $0x28] sm:$0xf]
      %v845 = vld [vmem:[%s833 + $0x2c] sm:$0xf]
      %v846 = vld [vmem:[%s833 + $0x30] sm:$0xf]
      %v847 = vld [vmem:[%s833 + $0x34] sm:$0xf]
      %v848 = vld [vmem:[%s833 + $0x38] sm:$0xf]
      %v849 = vld [vmem:[%s833 + $0x3c] sm:$0xf]
      %v866 = vunpack.c.l.b16 %v834
      %v867 = vunpack.c.l.b16 %v835
      %v868 = vunpack.c.l.b16 %v836
      %v869 = vunpack.c.l.b16 %v837
      %v870 = vunpack.c.l.b16 %v838
      %v871 = vunpack.c.l.b16 %v839
      %v872 = vunpack.c.l.b16 %v840
      %v873 = vunpack.c.l.b16 %v841
      %v874 = vunpack.c.l.b16 %v842
      %v875 = vunpack.c.l.b16 %v843
      %v876 = vunpack.c.l.b16 %v844
      %v877 = vunpack.c.l.b16 %v845
      %v878 = vunpack.c.l.b16 %v846
      %v879 = vunpack.c.l.b16 %v847
      %v880 = vunpack.c.l.b16 %v848
      %v881 = vunpack.c.l.b16 %v849
      %v882 = vpack.c.b16 %v867, %v866
      %v883 = vpack.c.b16 %v869, %v868
      %v884 = vpack.c.b16 %v871, %v870
      %v885 = vpack.c.b16 %v873, %v872
      %v886 = vpack.c.b16 %v875, %v874
      %v887 = vpack.c.b16 %v877, %v876
      %v888 = vpack.c.b16 %v879, %v878
      %v889 = vpack.c.b16 %v881, %v880
      %898 = vmatpush.bf16.msra.mxu0 %v889
      %899 = vmatpush.bf16.msra.mxu0 %v888
      %900 = vmatpush.bf16.msra.mxu0 %v887
      %901 = vmatpush.bf16.msra.mxu0 %v886
      %902 = vmatpush.bf16.msra.mxu0 %v885
      %903 = vmatpush.bf16.msra.mxu0 %v884
      %904 = vmatpush.bf16.msra.mxu0 %v883
      %905 = vmatpush.bf16.msra.mxu0 %v882
      %906 = vmatmul.bf16.gmra.mxu0 %v829
      %v907 = vpop.f32.mrf.mxu0
      %v908 = vadd.f32 0.0, %v907
      %v909 = vpop.f32.mrf.mxu0
      %v910 = vadd.f32 0.0, %v909
      %911 = vmatmul.bf16.gmra.mxu0 %v830
      %v912 = vpop.f32.mrf.mxu0
      %v913 = vadd.f32 0.0, %v912
      %v914 = vpop.f32.mrf.mxu0
      %v915 = vadd.f32 0.0, %v914
      %916 = vmatmul.bf16.gmra.mxu0 %v831
      %v917 = vpop.f32.mrf.mxu0
      %v918 = vadd.f32 0.0, %v917
      %v919 = vpop.f32.mrf.mxu0
      %v920 = vadd.f32 0.0, %v919
      %921 = vmatmul.bf16.gmra.mxu0 %v832
      %v922 = vpop.f32.mrf.mxu0
      %v923 = vadd.f32 0.0, %v922
      %v924 = vpop.f32.mrf.mxu0
      %v925 = vadd.f32 0.0, %v924
      %926 = vdwg.mxu0
      %v927 = vadd.f32 %v811, %v908
      %v928 = vadd.f32 %v812, %v910
      %v929 = vadd.f32 %v813, %v913
      %v930 = vadd.f32 %v814, %v915
      %v931 = vadd.f32 %v815, %v918
      %v932 = vadd.f32 %v816, %v920
      %v933 = vadd.f32 %v817, %v923
      %v934 = vadd.f32 %v818, %v925
      %s935 = sadd.s32 %s256, 20
      %s936 = scalar_lea.vmem %s0, %s935
      %v937 = vld [vmem:[%s936] sm:$0xff]
      %v938 = vld [vmem:[%s936 + $0x8] sm:$0xff]
      %v939 = vld [vmem:[%s936 + $0x10] sm:$0xff]
      %v940 = vld [vmem:[%s936 + $0x18] sm:$0xff]
      %v941 = vld [vmem:[%s936 + $0x20] sm:$0xff]
      %v942 = vld [vmem:[%s936 + $0x28] sm:$0xff]
      %v943 = vld [vmem:[%s936 + $0x30] sm:$0xff]
      %v944 = vld [vmem:[%s936 + $0x38] sm:$0xff]
      %v945 = vpack.c.bf16 %v938, %v937
      %v946 = vpack.c.bf16 %v940, %v939
      %v947 = vpack.c.bf16 %v942, %v941
      %v948 = vpack.c.bf16 %v944, %v943
      %s949 = scalar_lea.vmem %s1, 384
      %v950 = vld [vmem:[%s949] sm:$0xf]
      %v951 = vld [vmem:[%s949 + $0x4] sm:$0xf]
      %v952 = vld [vmem:[%s949 + $0x8] sm:$0xf]
      %v953 = vld [vmem:[%s949 + $0xc] sm:$0xf]
      %v954 = vld [vmem:[%s949 + $0x10] sm:$0xf]
      %v955 = vld [vmem:[%s949 + $0x14] sm:$0xf]
      %v956 = vld [vmem:[%s949 + $0x18] sm:$0xf]
      %v957 = vld [vmem:[%s949 + $0x1c] sm:$0xf]
      %v958 = vld [vmem:[%s949 + $0x20] sm:$0xf]
      %v959 = vld [vmem:[%s949 + $0x24] sm:$0xf]
      %v960 = vld [vmem:[%s949 + $0x28] sm:$0xf]
      %v961 = vld [vmem:[%s949 + $0x2c] sm:$0xf]
      %v962 = vld [vmem:[%s949 + $0x30] sm:$0xf]
      %v963 = vld [vmem:[%s949 + $0x34] sm:$0xf]
      %v964 = vld [vmem:[%s949 + $0x38] sm:$0xf]
      %v965 = vld [vmem:[%s949 + $0x3c] sm:$0xf]
      %v982 = vunpack.c.l.b16 %v950
      %v983 = vunpack.c.l.b16 %v951
      %v984 = vunpack.c.l.b16 %v952
      %v985 = vunpack.c.l.b16 %v953
      %v986 = vunpack.c.l.b16 %v954
      %v987 = vunpack.c.l.b16 %v955
      %v988 = vunpack.c.l.b16 %v956
      %v989 = vunpack.c.l.b16 %v957
      %v990 = vunpack.c.l.b16 %v958
      %v991 = vunpack.c.l.b16 %v959
      %v992 = vunpack.c.l.b16 %v960
      %v993 = vunpack.c.l.b16 %v961
      %v994 = vunpack.c.l.b16 %v962
      %v995 = vunpack.c.l.b16 %v963
      %v996 = vunpack.c.l.b16 %v964
      %v997 = vunpack.c.l.b16 %v965
      %v998 = vpack.c.b16 %v983, %v982
      %v999 = vpack.c.b16 %v985, %v984
      %v1000 = vpack.c.b16 %v987, %v986
      %v1001 = vpack.c.b16 %v989, %v988
      %v1002 = vpack.c.b16 %v991, %v990
      %v1003 = vpack.c.b16 %v993, %v992
      %v1004 = vpack.c.b16 %v995, %v994
      %v1005 = vpack.c.b16 %v997, %v996
      %1014 = vmatpush.bf16.msra.mxu0 %v1005
      %1015 = vmatpush.bf16.msra.mxu0 %v1004
      %1016 = vmatpush.bf16.msra.mxu0 %v1003
      %1017 = vmatpush.bf16.msra.mxu0 %v1002
      %1018 = vmatpush.bf16.msra.mxu0 %v1001
      %1019 = vmatpush.bf16.msra.mxu0 %v1000
      %1020 = vmatpush.bf16.msra.mxu0 %v999
      %1021 = vmatpush.bf16.msra.mxu0 %v998
      %1022 = vmatmul.bf16.gmra.mxu0 %v945
      %v1023 = vpop.f32.mrf.mxu0
      %v1024 = vadd.f32 0.0, %v1023
      %v1025 = vpop.f32.mrf.mxu0
      %v1026 = vadd.f32 0.0, %v1025
      %1027 = vmatmul.bf16.gmra.mxu0 %v946
      %v1028 = vpop.f32.mrf.mxu0
      %v1029 = vadd.f32 0.0, %v1028
      %v1030 = vpop.f32.mrf.mxu0
      %v1031 = vadd.f32 0.0, %v1030
      %1032 = vmatmul.bf16.gmra.mxu0 %v947
      %v1033 = vpop.f32.mrf.mxu0
      %v1034 = vadd.f32 0.0, %v1033
      %v1035 = vpop.f32.mrf.mxu0
      %v1036 = vadd.f32 0.0, %v1035
      %1037 = vmatmul.bf16.gmra.mxu0 %v948
      %v1038 = vpop.f32.mrf.mxu0
      %v1039 = vadd.f32 0.0, %v1038
      %v1040 = vpop.f32.mrf.mxu0
      %v1041 = vadd.f32 0.0, %v1040
      %1042 = vdwg.mxu0
      %v1043 = vadd.f32 %v927, %v1024
      %v1044 = vadd.f32 %v928, %v1026
      %v1045 = vadd.f32 %v929, %v1029
      %v1046 = vadd.f32 %v930, %v1031
      %v1047 = vadd.f32 %v931, %v1034
      %v1048 = vadd.f32 %v932, %v1036
      %v1049 = vadd.f32 %v933, %v1039
      %v1050 = vadd.f32 %v934, %v1041
      %s1051 = sadd.s32 %s256, 21
      %s1052 = scalar_lea.vmem %s0, %s1051
      %v1053 = vld [vmem:[%s1052] sm:$0xff]
      %v1054 = vld [vmem:[%s1052 + $0x8] sm:$0xff]
      %v1055 = vld [vmem:[%s1052 + $0x10] sm:$0xff]
      %v1056 = vld [vmem:[%s1052 + $0x18] sm:$0xff]
      %v1057 = vld [vmem:[%s1052 + $0x20] sm:$0xff]
      %v1058 = vld [vmem:[%s1052 + $0x28] sm:$0xff]
      %v1059 = vld [vmem:[%s1052 + $0x30] sm:$0xff]
      %v1060 = vld [vmem:[%s1052 + $0x38] sm:$0xff]
      %v1061 = vpack.c.bf16 %v1054, %v1053
      %v1062 = vpack.c.bf16 %v1056, %v1055
      %v1063 = vpack.c.bf16 %v1058, %v1057
      %v1064 = vpack.c.bf16 %v1060, %v1059
      %s1065 = scalar_lea.vmem %s1, 448
      %v1066 = vld [vmem:[%s1065] sm:$0xf]
      %v1067 = vld [vmem:[%s1065 + $0x4] sm:$0xf]
      %v1068 = vld [vmem:[%s1065 + $0x8] sm:$0xf]
      %v1069 = vld [vmem:[%s1065 + $0xc] sm:$0xf]
      %v1070 = vld [vmem:[%s1065 + $0x10] sm:$0xf]
      %v1071 = vld [vmem:[%s1065 + $0x14] sm:$0xf]
      %v1072 = vld [vmem:[%s1065 + $0x18] sm:$0xf]
      %v1073 = vld [vmem:[%s1065 + $0x1c] sm:$0xf]
      %v1074 = vld [vmem:[%s1065 + $0x20] sm:$0xf]
      %v1075 = vld [vmem:[%s1065 + $0x24] sm:$0xf]
      %v1076 = vld [vmem:[%s1065 + $0x28] sm:$0xf]
      %v1077 = vld [vmem:[%s1065 + $0x2c] sm:$0xf]
      %v1078 = vld [vmem:[%s1065 + $0x30] sm:$0xf]
      %v1079 = vld [vmem:[%s1065 + $0x34] sm:$0xf]
      %v1080 = vld [vmem:[%s1065 + $0x38] sm:$0xf]
      %v1081 = vld [vmem:[%s1065 + $0x3c] sm:$0xf]
      %v1098 = vunpack.c.l.b16 %v1066
      %v1099 = vunpack.c.l.b16 %v1067
      %v1100 = vunpack.c.l.b16 %v1068
      %v1101 = vunpack.c.l.b16 %v1069
      %v1102 = vunpack.c.l.b16 %v1070
      %v1103 = vunpack.c.l.b16 %v1071
      %v1104 = vunpack.c.l.b16 %v1072
      %v1105 = vunpack.c.l.b16 %v1073
      %v1106 = vunpack.c.l.b16 %v1074
      %v1107 = vunpack.c.l.b16 %v1075
      %v1108 = vunpack.c.l.b16 %v1076
      %v1109 = vunpack.c.l.b16 %v1077
      %v1110 = vunpack.c.l.b16 %v1078
      %v1111 = vunpack.c.l.b16 %v1079
      %v1112 = vunpack.c.l.b16 %v1080
      %v1113 = vunpack.c.l.b16 %v1081
      %v1114 = vpack.c.b16 %v1099, %v1098
      %v1115 = vpack.c.b16 %v1101, %v1100
      %v1116 = vpack.c.b16 %v1103, %v1102
      %v1117 = vpack.c.b16 %v1105, %v1104
      %v1118 = vpack.c.b16 %v1107, %v1106
      %v1119 = vpack.c.b16 %v1109, %v1108
      %v1120 = vpack.c.b16 %v1111, %v1110
      %v1121 = vpack.c.b16 %v1113, %v1112
      %1130 = vmatpush.bf16.msra.mxu0 %v1121
      %1131 = vmatpush.bf16.msra.mxu0 %v1120
      %1132 = vmatpush.bf16.msra.mxu0 %v1119
      %1133 = vmatpush.bf16.msra.mxu0 %v1118
      %1134 = vmatpush.bf16.msra.mxu0 %v1117
      %1135 = vmatpush.bf16.msra.mxu0 %v1116
      %1136 = vmatpush.bf16.msra.mxu0 %v1115
      %1137 = vmatpush.bf16.msra.mxu0 %v1114
      %1138 = vmatmul.bf16.gmra.mxu0 %v1061
      %v1139 = vpop.f32.mrf.mxu0
      %v1140 = vadd.f32 0.0, %v1139
      %v1141 = vpop.f32.mrf.mxu0
      %v1142 = vadd.f32 0.0, %v1141
      %1143 = vmatmul.bf16.gmra.mxu0 %v1062
      %v1144 = vpop.f32.mrf.mxu0
      %v1145 = vadd.f32 0.0, %v1144
      %v1146 = vpop.f32.mrf.mxu0
      %v1147 = vadd.f32 0.0, %v1146
      %1148 = vmatmul.bf16.gmra.mxu0 %v1063
      %v1149 = vpop.f32.mrf.mxu0
      %v1150 = vadd.f32 0.0, %v1149
      %v1151 = vpop.f32.mrf.mxu0
      %v1152 = vadd.f32 0.0, %v1151
      %1153 = vmatmul.bf16.gmra.mxu0 %v1064
      %v1154 = vpop.f32.mrf.mxu0
      %v1155 = vadd.f32 0.0, %v1154
      %v1156 = vpop.f32.mrf.mxu0
      %v1157 = vadd.f32 0.0, %v1156
      %1158 = vdwg.mxu0
      %v1159 = vadd.f32 %v1043, %v1140
      %v1160 = vadd.f32 %v1044, %v1142
      %v1161 = vadd.f32 %v1045, %v1145
      %v1162 = vadd.f32 %v1046, %v1147
      %v1163 = vadd.f32 %v1047, %v1150
      %v1164 = vadd.f32 %v1048, %v1152
      %v1165 = vadd.f32 %v1049, %v1155
      %v1166 = vadd.f32 %v1050, %v1157
      %s1167 = sadd.s32 %s256, 22
      %s1168 = scalar_lea.vmem %s0, %s1167
      %v1169 = vld [vmem:[%s1168] sm:$0xff]
      %v1170 = vld [vmem:[%s1168 + $0x8] sm:$0xff]
      %v1171 = vld [vmem:[%s1168 + $0x10] sm:$0xff]
      %v1172 = vld [vmem:[%s1168 + $0x18] sm:$0xff]
      %v1173 = vld [vmem:[%s1168 + $0x20] sm:$0xff]
      %v1174 = vld [vmem:[%s1168 + $0x28] sm:$0xff]
      %v1175 = vld [vmem:[%s1168 + $0x30] sm:$0xff]
      %v1176 = vld [vmem:[%s1168 + $0x38] sm:$0xff]
      %v1177 = vpack.c.bf16 %v1170, %v1169
      %v1178 = vpack.c.bf16 %v1172, %v1171
      %v1179 = vpack.c.bf16 %v1174, %v1173
      %v1180 = vpack.c.bf16 %v1176, %v1175
      %s1181 = scalar_lea.vmem %s1, 512
      %v1182 = vld [vmem:[%s1181] sm:$0xf]
      %v1183 = vld [vmem:[%s1181 + $0x4] sm:$0xf]
      %v1184 = vld [vmem:[%s1181 + $0x8] sm:$0xf]
      %v1185 = vld [vmem:[%s1181 + $0xc] sm:$0xf]
      %v1186 = vld [vmem:[%s1181 + $0x10] sm:$0xf]
      %v1187 = vld [vmem:[%s1181 + $0x14] sm:$0xf]
      %v1188 = vld [vmem:[%s1181 + $0x18] sm:$0xf]
      %v1189 = vld [vmem:[%s1181 + $0x1c] sm:$0xf]
      %v1190 = vld [vmem:[%s1181 + $0x20] sm:$0xf]
      %v1191 = vld [vmem:[%s1181 + $0x24] sm:$0xf]
      %v1192 = vld [vmem:[%s1181 + $0x28] sm:$0xf]
      %v1193 = vld [vmem:[%s1181 + $0x2c] sm:$0xf]
      %v1194 = vld [vmem:[%s1181 + $0x30] sm:$0xf]
      %v1195 = vld [vmem:[%s1181 + $0x34] sm:$0xf]
      %v1196 = vld [vmem:[%s1181 + $0x38] sm:$0xf]
      %v1197 = vld [vmem:[%s1181 + $0x3c] sm:$0xf]
      %v1214 = vunpack.c.l.b16 %v1182
      %v1215 = vunpack.c.l.b16 %v1183
      %v1216 = vunpack.c.l.b16 %v1184
      %v1217 = vunpack.c.l.b16 %v1185
      %v1218 = vunpack.c.l.b16 %v1186
      %v1219 = vunpack.c.l.b16 %v1187
      %v1220 = vunpack.c.l.b16 %v1188
      %v1221 = vunpack.c.l.b16 %v1189
      %v1222 = vunpack.c.l.b16 %v1190
      %v1223 = vunpack.c.l.b16 %v1191
      %v1224 = vunpack.c.l.b16 %v1192
      %v1225 = vunpack.c.l.b16 %v1193
      %v1226 = vunpack.c.l.b16 %v1194
      %v1227 = vunpack.c.l.b16 %v1195
      %v1228 = vunpack.c.l.b16 %v1196
      %v1229 = vunpack.c.l.b16 %v1197
      %v1230 = vpack.c.b16 %v1215, %v1214
      %v1231 = vpack.c.b16 %v1217, %v1216
      %v1232 = vpack.c.b16 %v1219, %v1218
      %v1233 = vpack.c.b16 %v1221, %v1220
      %v1234 = vpack.c.b16 %v1223, %v1222
      %v1235 = vpack.c.b16 %v1225, %v1224
      %v1236 = vpack.c.b16 %v1227, %v1226
      %v1237 = vpack.c.b16 %v1229, %v1228
      %1246 = vmatpush.bf16.msra.mxu0 %v1237
      %1247 = vmatpush.bf16.msra.mxu0 %v1236
      %1248 = vmatpush.bf16.msra.mxu0 %v1235
      %1249 = vmatpush.bf16.msra.mxu0 %v1234
      %1250 = vmatpush.bf16.msra.mxu0 %v1233
      %1251 = vmatpush.bf16.msra.mxu0 %v1232
      %1252 = vmatpush.bf16.msra.mxu0 %v1231
      %1253 = vmatpush.bf16.msra.mxu0 %v1230
      %1254 = vmatmul.bf16.gmra.mxu0 %v1177
      %v1255 = vpop.f32.mrf.mxu0
      %v1256 = vadd.f32 0.0, %v1255
      %v1257 = vpop.f32.mrf.mxu0
      %v1258 = vadd.f32 0.0, %v1257
      %1259 = vmatmul.bf16.gmra.mxu0 %v1178
      %v1260 = vpop.f32.mrf.mxu0
      %v1261 = vadd.f32 0.0, %v1260
      %v1262 = vpop.f32.mrf.mxu0
      %v1263 = vadd.f32 0.0, %v1262
      %1264 = vmatmul.bf16.gmra.mxu0 %v1179
      %v1265 = vpop.f32.mrf.mxu0
      %v1266 = vadd.f32 0.0, %v1265
      %v1267 = vpop.f32.mrf.mxu0
      %v1268 = vadd.f32 0.0, %v1267
      %1269 = vmatmul.bf16.gmra.mxu0 %v1180
      %v1270 = vpop.f32.mrf.mxu0
      %v1271 = vadd.f32 0.0, %v1270
      %v1272 = vpop.f32.mrf.mxu0
      %v1273 = vadd.f32 0.0, %v1272
      %1274 = vdwg.mxu0
      %v1275 = vadd.f32 %v1159, %v1256
      %v1276 = vadd.f32 %v1160, %v1258
      %v1277 = vadd.f32 %v1161, %v1261
      %v1278 = vadd.f32 %v1162, %v1263
      %v1279 = vadd.f32 %v1163, %v1266
      %v1280 = vadd.f32 %v1164, %v1268
      %v1281 = vadd.f32 %v1165, %v1271
      %v1282 = vadd.f32 %v1166, %v1273
      %v1283 = vld [vmem:[%s2] sm:$0x1]
      %v1285 = vperm.slane %v1283, 0
      %v1287 = vadd.f32 %v1275, %v1285
      %v1288 = vadd.f32 %v1276, %v1285
      %v1289 = vadd.f32 %v1277, %v1285
      %v1290 = vadd.f32 %v1278, %v1285
      %v1291 = vadd.f32 %v1279, %v1285
      %v1292 = vadd.f32 %v1280, %v1285
      %v1293 = vadd.f32 %v1281, %v1285
      %v1294 = vadd.f32 %v1282, %v1285
      %v1295 = vld [vmem:[%s247] sm:$0xf]
      %v1296 = vld [vmem:[%s247 + $0x4] sm:$0xf]
      %v1297 = vld [vmem:[%s247 + $0x8] sm:$0xf]
      %v1298 = vld [vmem:[%s247 + $0xc] sm:$0xf]
      %v1299 = vld [vmem:[%s247 + $0x10] sm:$0xf]
      %v1300 = vld [vmem:[%s247 + $0x14] sm:$0xf]
      %v1301 = vld [vmem:[%s247 + $0x18] sm:$0xf]
      %v1302 = vld [vmem:[%s247 + $0x1c] sm:$0xf]
      %v1303 = vld [vmem:[%s4] sm:$0x3]
      %v1312 = vunpack.c.l.b16 %v1295
      %v1313 = vunpack.c.l.b16 %v1296
      %v1314 = vunpack.c.l.b16 %v1297
      %v1315 = vunpack.c.l.b16 %v1298
      %v1316 = vunpack.c.l.b16 %v1299
      %v1317 = vunpack.c.l.b16 %v1300
      %v1318 = vunpack.c.l.b16 %v1301
      %v1319 = vunpack.c.l.b16 %v1302
      %v1320 = vpack.c.b16 %v1313, %v1312
      %v1321 = vpack.c.b16 %v1315, %v1314
      %v1322 = vpack.c.b16 %v1317, %v1316
      %v1323 = vpack.c.b16 %v1319, %v1318
      %vm1324 = vcmask 31744
      %v1326 = vsel %vm1324, %v1320, 0
      %v1329 = vsel %vm1324, %v1321, 0
      %v1332 = vsel %vm1324, %v1322, 0
      %v1335 = vsel %vm1324, %v1323, 0
      %vm1337 = vcmask 1041408
      %v1339 = vsel %vm1337, %v1303, 0
      %1341 = vmatpush.bf16.msra.mxu0 0
      %1342 = vmatpush.bf16.msra.mxu0 0
      %1343 = vmatpush.bf16.msra.mxu0 0
      %1344 = vmatpush.bf16.msra.mxu0 0
      %1345 = vmatpush.bf16.msra.mxu0 0
      %1346 = vmatpush.bf16.msra.mxu0 0
      %1347 = vmatpush.bf16.msra.mxu0 0
      %1348 = vmatpush.bf16.msra.mxu0 %v1339
      %1349 = vmatmul.bf16.gmra.mxu0 %v1326
      %v1350 = vpop.f32.mrf.mxu0
      %v1351 = vadd.f32 0.0, %v1350
      %v1352 = vpop.f32.mrf.mxu0
      %v1353 = vadd.f32 0.0, %v1352
      %1354 = vmatmul.bf16.gmra.mxu0 %v1329
      %v1355 = vpop.f32.mrf.mxu0
      %v1356 = vadd.f32 0.0, %v1355
      %v1357 = vpop.f32.mrf.mxu0
      %v1358 = vadd.f32 0.0, %v1357
      %1359 = vmatmul.bf16.gmra.mxu0 %v1332
      %v1360 = vpop.f32.mrf.mxu0
      %v1361 = vadd.f32 0.0, %v1360
      %v1362 = vpop.f32.mrf.mxu0
      %v1363 = vadd.f32 0.0, %v1362
      %1364 = vmatmul.bf16.gmra.mxu0 %v1335
      %v1365 = vpop.f32.mrf.mxu0
      %v1366 = vadd.f32 0.0, %v1365
      %v1367 = vpop.f32.mrf.mxu0
      %v1368 = vadd.f32 0.0, %v1367
      %1369 = vdwg.mxu0
      %v1370 = vadd.f32 %v1287, %v1351
      %v1371 = vadd.f32 %v1288, %v1353
      %v1372 = vadd.f32 %v1289, %v1356
      %v1373 = vadd.f32 %v1290, %v1358
      %v1374 = vadd.f32 %v1291, %v1361
      %v1375 = vadd.f32 %v1292, %v1363
      %v1376 = vadd.f32 %v1293, %v1366
      %v1377 = vadd.f32 %v1294, %v1368
      %v1378 = vld [vmem:[%s5] sm:$0x1]
      %v1380 = vperm.slane %v1378, 0
      %v1382 = vadd.f32 %v1370, %v1380
      %v1383 = vadd.f32 %v1371, %v1380
      %v1384 = vadd.f32 %v1372, %v1380
      %v1385 = vadd.f32 %v1373, %v1380
      %v1386 = vadd.f32 %v1374, %v1380
      %v1387 = vadd.f32 %v1375, %v1380
      %v1388 = vadd.f32 %v1376, %v1380
      %v1389 = vadd.f32 %v1377, %v1380
      %v1390 = vmax.f32 %v1382, 0.0
      %v1391 = vmax.f32 %v1383, 0.0
      %v1392 = vmax.f32 %v1384, 0.0
      %v1393 = vmax.f32 %v1385, 0.0
      %v1394 = vmax.f32 %v1386, 0.0
      %v1395 = vmax.f32 %v1387, 0.0
      %v1396 = vmax.f32 %v1388, 0.0
      %v1397 = vmax.f32 %v1389, 0.0
      %1398 = vst [vmem:[%s253] sm:$0xff] %v1390
      %1399 = vst [vmem:[%s253 + $0x8] sm:$0xff] %v1391
      %1400 = vst [vmem:[%s253 + $0x10] sm:$0xff] %v1392
      %1401 = vst [vmem:[%s253 + $0x18] sm:$0xff] %v1393
      %1402 = vst [vmem:[%s253 + $0x20] sm:$0xff] %v1394
      %1403 = vst [vmem:[%s253 + $0x28] sm:$0xff] %v1395
      %1404 = vst [vmem:[%s253 + $0x30] sm:$0xff] %v1396
      %1405 = vst [vmem:[%s253 + $0x38] sm:$0xff] %v1397
      %s1406 = smul.u32 8, %s17
      %p1407 = scmp.lt.s32.totalorder %s1406, 31
      %s1408 = scalar_select %p1407, %s1406, 31
      %s1409 = smul.addr %s1408, 8
      %s1410 = scalar_lea.vmem %s6, %s1409
      // Predicated region
      $region45: #{basic_block_forward.3} parent=43 // pred_check
        %p1411 = pneg %p166
      $region46: #{basic_block_forward.3} parent=43 // pred_check_branch
        %1413 = sbr.rel (%p1411) target = $region48
      $region47: #{basic_block_forward.3} parent=43 // pred_region
        %s1414 = smul.u32 8, %s17
      $region48: #{basic_block_forward.3} parent=43 // pred_fallthru
        _
    $region44: #{basic_block_forward.3} parent=5 // pred_fallthru
      _
    %p1415 = scmp.le.s32.totalorder 2, %s12
    // Predicated region
    $region49: #{basic_block_forward.3} parent=5 // pred_check
      %p1416 = pneg %p1415
    $region50: #{basic_block_forward.3} parent=5 // pred_check_branch
      %1418 = sbr.rel (%p1416) target = $region52
    $region51: #{basic_block_forward.3} parent=5 // pred_region
      %s1419 = ssub.s32 %s12, 2
      // Predicated region
      $region53: #{basic_block_forward.3} parent=51 // pred_check
        %p1420 = pneg %p172
      $region54: #{basic_block_forward.3} parent=51 // pred_check_branch
        %1422 = sbr.rel (%p1420) target = $region56
      $region55: #{basic_block_forward.3} parent=51 // pred_region
        %s1423 = smul.u32 8, %s18
        %p1424 = scmp.lt.s32.totalorder %s1423, 31
        %s1425 = scalar_select %p1424, %s1423, 31
        %s1426 = smul.addr %s1425, 8
        %s1427 = scalar_lea.vmem %s6, %s1426
      $region56: #{basic_block_forward.3} parent=51 // pred_fallthru
        _
    $region52: #{basic_block_forward.3} parent=5 // pred_fallthru
      _
  $region6: #{basic_block_forward.3} parent=0 // loop_footer
    %s16 = sadd.s32 1, %s12
  $region7: #{basic_block_forward.3} parent=0 // loop_footer_branch
    %11 = sbr.rel target = $region3
  $region8: #{basic_block_forward.3} parent=0 // loop_exit
    _

</llo_original>
